<compile_context>
chip_gen: v6e
topology: v6e:2x2x1
jax: 0.10.0
libtpu: 0.0.40
codegen_flags: <defaults>
</compile_context>

<pallas_src>
import jax
import jax.numpy as jnp
from jax.experimental import pallas as pl
from jax.experimental.pallas import tpu as pltpu


# ----------------------------- small helpers --------------------------------

def _round_up(x, m):
    return (x + m - 1) // m * m


def _silu(x):
    return x * jax.nn.sigmoid(x)


def _layernorm(x, eps):
    mu = jnp.mean(x, axis=-1, keepdims=True)
    xc = x - mu
    var = jnp.mean(xc * xc, axis=-1, keepdims=True)
    return xc * jax.lax.rsqrt(var + eps)


def _mm(a, w):
    # bf16 MXU matmul with f32 accumulation.
    return jnp.dot(a.astype(jnp.bfloat16), w, preferred_element_type=jnp.float32)


def _proj_jax(x, w1, b1, w2, b2):
    # Projector MLP in plain JAX (used only for the tiny B-row time embedding).
    return _mm(_silu(_mm(x, w1) + b1), w2) + b2


def _patchify(x, patch_size):
    B, C, H, W = x.shape
    h, w, p = H // patch_size, W // patch_size, patch_size
    # nchpwq -> nhwpqc, then flatten per-patch
    xp = x.reshape(B, C, h, p, w, p).transpose(0, 2, 4, 3, 5, 1)
    return xp.reshape(B, h * w, p * p * C)


def _freq_embed(timestep, freq_dim):
    half = freq_dim // 2
    log_theta = 9.210340371976184
    freq = jnp.exp(jnp.arange(half, dtype=jnp.float32) * (-log_theta / half))
    emb = timestep.astype(jnp.float32)[:, None] * freq[None, :]
    return jnp.concatenate([jnp.cos(emb), jnp.sin(emb)], axis=-1)


# ----------------------------- Pallas kernel ---------------------------------

def _fused_kernel(xp_ref, z_ref, t_ref,               # per-row-tile activations
                  pw_ref, pb_ref,                     # patch embed
                  cw1_ref, cb1_ref, cw2_ref, cb2_ref,  # cond projector
                  hw_ref, hb_ref,                     # head (padded to 256 lanes)
                  nwss_ref, nbss_ref,                 # final AdaLN (shift|scale)
                  wss_ref, wg_ref, w1_ref, w2_ref, aff_ref,  # per-layer (index l)
                  o_ref,                              # output
                  xt_ref, zs_ref):                    # VMEM scratch
    """grid = (row_tiles [parallel], depth [arbitrary]).

    l == 0          : patch-embed Linear -> residual accumulator; cond projector
                      zs = SiLU(fc2(SiLU(fc1(z))) + t) -> bf16 scratch.
    every l         : one DiffusionBlock (AdaLN-Zero -> Projector -> LN -> gate+res).
    l == depth - 1  : final AdaLayerNormZero(num_stats=2) + head Linear into a
                      256-lane-dense output slab.
    The residual stream xt_ref and zs_ref stay in VMEM across the depth sweep.
    """
    l = pl.program_id(1)
    D = xt_ref.shape[-1]

    @pl.when(l == 0)
    def _():
        # Patch-embed Linear into the residual accumulator.
        xt_ref[...] = (jnp.dot(xp_ref[...], pw_ref[...],
                               preferred_element_type=jnp.float32) + pb_ref[...])
        # Cond projector + SiLU, computed once per row tile, stored bf16
        # (zs is only ever a matmul input downstream).
        c = jnp.dot(z_ref[...], cw1_ref[...],
                    preferred_element_type=jnp.float32) + cb1_ref[...]
        c = _silu(c)
        c = jnp.dot(c.astype(jnp.bfloat16), cw2_ref[...],
                    preferred_element_type=jnp.float32) + cb2_ref[...]
        zs_ref[...] = _silu(c + t_ref[...]).astype(jnp.bfloat16)

    zs = zs_ref[...]            # (tm, D) bf16
    xt = xt_ref[...]            # (tm, D) f32   — residual stream
    aff = aff_ref[0]            # (8, D) f32    — packed per-layer affine vectors

    # AdaLayerNormZero: shift|scale in one merged (D, 2D) matmul.
    ss = jnp.dot(zs, wss_ref[0], preferred_element_type=jnp.float32)
    shift = ss[:, :D] + aff[0:1]
    scale = ss[:, D:] + aff[1:2]

    h = _layernorm(xt, 1e-6) * (1.0 + scale) + shift
    h = jnp.dot(h.astype(jnp.bfloat16), w1_ref[0],
                preferred_element_type=jnp.float32) + aff[3:4]
    h = _silu(h)
    h = jnp.dot(h.astype(jnp.bfloat16), w2_ref[0],
                preferred_element_type=jnp.float32) + aff[4:5]
    h = _layernorm(h, 1e-5) * aff[5:6] + aff[6:7]

    # Deferred gate matmul: shrinks the peak live set and lets the MXU overlap
    # the VPU-heavy norm2 epilogue above.
    gate = jnp.dot(zs, wg_ref[0], preferred_element_type=jnp.float32) + aff[2:3]
    xt = h * gate + xt
    xt_ref[...] = xt

    @pl.when(l == pl.num_programs(1) - 1)
    def _():
        ssf = jnp.dot(zs, nwss_ref[...],
                      preferred_element_type=jnp.float32) + nbss_ref[...]
        hf = _layernorm(xt, 1e-6) * (1.0 + ssf[:, D:]) + ssf[:, :D]
        o_ref[...] = (jnp.dot(hf.astype(jnp.bfloat16), hw_ref[...],
                              preferred_element_type=jnp.float32) + hb_ref[...])


# ----------------------------- parameters -----------------------------------

def init_params(key, depth, embed_dim, cond_dim, patch_size, image_dim,
                freq_dim=256):
    D = embed_dim
    PC = patch_size * patch_size * image_dim
    PCpad = _round_up(PC, 256)      # 256-lane-dense head output (MXU width)
    ks = iter(jax.random.split(key, 32))

    def w(shape, scale=0.02, dtype=jnp.bfloat16):
        return (jax.random.normal(next(ks), shape, jnp.float32) * scale).astype(dtype)

    p = dict(patch_size=patch_size, embed_dim=D, freq_dim=freq_dim, depth=depth)
    # Weight matrices in bf16 (matmul inputs); biases / LN affine in f32.
    p["patch_w"] = w((PC, D));        p["patch_b"] = w((1, D), dtype=jnp.float32)
    p["tp_w1"] = w((freq_dim, D));    p["tp_b1"] = w((1, D), dtype=jnp.float32)
    p["tp_w2"] = w((D, D));           p["tp_b2"] = w((1, D), dtype=jnp.float32)
    p["cp_w1"] = w((cond_dim, D));    p["cp_b1"] = w((1, D), dtype=jnp.float32)
    p["cp_w2"] = w((D, D));           p["cp_b2"] = w((1, D), dtype=jnp.float32)

    # Per-block weights, pre-packed for the fused kernel (hoisted out of the
    # per-forward path):
    #   blk_wss : AdaLN-Zero shift|scale weights merged -> one (D, 2D) matmul
    #   blk_wg  : AdaLN-Zero gate weight, separate so the gate dot is deferred
    #   blk_aff : all per-layer (1, D) affine vectors packed into one (8, D) DMA:
    #             rows = [bz_shift, bz_scale, bz_gate, b1, b2, ln2_w, ln2_b, pad]
    p["blk_wss"] = w((depth, D, 2 * D))
    p["blk_wg"] = w((depth, D, D))
    p["blk_w1"] = w((depth, D, D))
    p["blk_w2"] = w((depth, D, D))
    aff = jax.random.normal(next(ks), (depth, 8, D), jnp.float32) * 0.02
    aff = aff.at[:, 5].set(1.0)     # norm2 (LayerNorm) weight
    aff = aff.at[:, 6].set(0.0)     # norm2 (LayerNorm) bias
    aff = aff.at[:, 7].set(0.0)     # padding row
    p["blk_aff"] = aff

    # Final AdaLayerNormZero (num_stats=2: shift|scale merged) + head Linear,
    # head pre-padded to the 256-lane-dense output width.
    p["norm_wss"] = w((D, 2 * D))
    p["norm_bss"] = w((1, 2 * D), dtype=jnp.float32)
    head_w = w((D, PC))
    head_b = w((1, PC), dtype=jnp.float32)
    p["head_w"] = jnp.pad(head_w, ((0, 0), (0, PCpad - PC)))
    p["head_b"] = jnp.pad(head_b, ((0, 0), (0, PCpad - PC)))
    return p


# ----------------------------- forward (Pallas) ------------------------------

def diffusion_mlp_forward(params, x, timestep, z, *, tile_rows=1024,
                          vmem_limit_bytes=64 * 1024 * 1024):
    """x: (B, C, H, W) NCHW; timestep: (B,); z: (B, N, cond_dim)."""
    B, C, H, W = x.shape
    p_sz = params["patch_size"]
    D = params["embed_dim"]
    depth = params["depth"]
    PC = p_sz * p_sz * C
    PCpad = params["head_w"].shape[-1]
    N = (H // p_sz) * (W // p_sz)
    M = B * N
    Cd = z.shape[-1]

    # Glue: patchify; tiny (B-row) time-embedding projector in plain JAX.
    xp = _patchify(x, p_sz).reshape(M, PC).astype(jnp.bfloat16)
    femb = _freq_embed(timestep, params["freq_dim"])
    t = _proj_jax(femb, params["tp_w1"], params["tp_b1"],
                  params["tp_w2"], params["tp_b2"])              # (B, D) f32
    t_rows = jnp.broadcast_to(t[:, None, :], (B, N, D)).reshape(M, D)
    z_flat = z.reshape(M, Cd).astype(jnp.bfloat16)

    # Row tiling: big tiles to amortize per-layer weight streaming (v6e), but
    # keep >= 2 row tiles so the parallel axis shards across v7x's two cores.
    tm = min(tile_rows, _round_up(M, 8))
    if M > 8 and _round_up(M, tm) // tm < 2:
        tm = _round_up((M + 1) // 2, 8)
    Mp = _round_up(M, tm)
    if Mp != M:
        pad = ((0, Mp - M), (0, 0))
        # Edge-replicate padding: padded rows see real data -> benign LayerNorm.
        xp = jnp.pad(xp, pad, mode="edge")
        z_flat = jnp.pad(z_flat, pad, mode="edge")
        t_rows = jnp.pad(t_rows, pad, mode="edge")
    n_row_tiles = Mp // tm

    out = pl.pallas_call(
        _fused_kernel,
        grid=(n_row_tiles, depth),
        in_specs=[
            pl.BlockSpec((tm, PC), lambda i, l: (i, 0)),            # xp (bf16)
            pl.BlockSpec((tm, Cd), lambda i, l: (i, 0)),            # z (bf16)
            pl.BlockSpec((tm, D), lambda i, l: (i, 0)),             # t rows (f32)
            pl.BlockSpec((PC, D), lambda i, l: (0, 0)),             # patch_w
            pl.BlockSpec((1, D), lambda i, l: (0, 0)),              # patch_b
            pl.BlockSpec((Cd, D), lambda i, l: (0, 0)),             # cp_w1
            pl.BlockSpec((1, D), lambda i, l: (0, 0)),              # cp_b1
            pl.BlockSpec((D, D), lambda i, l: (0, 0)),              # cp_w2
            pl.BlockSpec((1, D), lambda i, l: (0, 0)),              # cp_b2
            pl.BlockSpec((D, PCpad), lambda i, l: (0, 0)),          # head_w
            pl.BlockSpec((1, PCpad), lambda i, l: (0, 0)),          # head_b
            pl.BlockSpec((D, 2 * D), lambda i, l: (0, 0)),          # norm_wss
            pl.BlockSpec((1, 2 * D), lambda i, l: (0, 0)),          # norm_bss
            pl.BlockSpec((1, D, 2 * D), lambda i, l: (l, 0, 0)),    # blk_wss
            pl.BlockSpec((1, D, D), lambda i, l: (l, 0, 0)),        # blk_wg
            pl.BlockSpec((1, D, D), lambda i, l: (l, 0, 0)),        # blk_w1
            pl.BlockSpec((1, D, D), lambda i, l: (l, 0, 0)),        # blk_w2
            pl.BlockSpec((1, 8, D), lambda i, l: (l, 0, 0)),        # blk_aff
        ],
        out_specs=pl.BlockSpec((tm, PCpad), lambda i, l: (i, 0)),
        out_shape=jax.ShapeDtypeStruct((Mp, PCpad), jnp.float32),
        scratch_shapes=[pltpu.VMEM((tm, D), jnp.float32),           # residual xt
                        pltpu.VMEM((tm, D), jnp.bfloat16)],         # zs = SiLU(cond)
        compiler_params=pltpu.CompilerParams(
            dimension_semantics=("parallel", "arbitrary"),
            vmem_limit_bytes=vmem_limit_bytes),
    )(xp, z_flat, t_rows,
      params["patch_w"], params["patch_b"],
      params["cp_w1"], params["cp_b1"], params["cp_w2"], params["cp_b2"],
      params["head_w"], params["head_b"],
      params["norm_wss"], params["norm_bss"],
      params["blk_wss"], params["blk_wg"], params["blk_w1"], params["blk_w2"],
      params["blk_aff"])

    return out[:M, :PC].reshape(B, N, PC)


# ----------------------------- pure-JAX reference ----------------------------

def reference_forward(params, x, timestep, z):
    D = params["embed_dim"]
    p_sz = params["patch_size"]
    xp = _patchify(x, p_sz)                                        # (B, N, PC)
    PC = xp.shape[-1]
    tok = _mm(xp, params["patch_w"]) + params["patch_b"]
    femb = _freq_embed(timestep, params["freq_dim"])
    t = _proj_jax(femb, params["tp_w1"], params["tp_b1"],
                  params["tp_w2"], params["tp_b2"])
    c = _proj_jax(z, params["cp_w1"], params["cp_b1"],
                  params["cp_w2"], params["cp_b2"])
    zs = _silu(c + t[:, None, :]).astype(jnp.bfloat16)
    xt = tok
    for l in range(params["depth"]):
        aff = params["blk_aff"][l]
        ss = _mm(zs, params["blk_wss"][l])
        shift, scale = ss[..., :D] + aff[0], ss[..., D:] + aff[1]
        gate = _mm(zs, params["blk_wg"][l]) + aff[2]
        h = _layernorm(xt, 1e-6) * (1.0 + scale) + shift
        h = _silu(_mm(h, params["blk_w1"][l]) + aff[3])
        h = _mm(h, params["blk_w2"][l]) + aff[4]
        h = _layernorm(h, 1e-5) * aff[5] + aff[6]
        xt = h * gate + xt
    ssf = _mm(zs, params["norm_wss"]) + params["norm_bss"]
    hf = _layernorm(xt, 1e-6) * (1.0 + ssf[..., D:]) + ssf[..., :D]
    out = _mm(hf, params["head_w"]) + params["head_b"]
    return out[..., :PC]


# ----------------------------- main ------------------------------------------

if __name__ == "__main__":
    B, C, H, W = 2, 4, 16, 16
    depth, embed_dim, cond_dim, patch_size = 2, 32, 16, 2

    root = jax.random.PRNGKey(0)
    kp, k1, k2, k3 = jax.random.split(root, 4)
    params = init_params(kp, depth, embed_dim, cond_dim, patch_size, C)

    x = jax.random.normal(k1, (B, C, H, W), jnp.float32)
    timestep = jax.random.uniform(k2, (B,), jnp.float32) * 1000.0
    N = (H // patch_size) * (W // patch_size)
    z = jax.random.normal(k3, (B, N, cond_dim), jnp.float32)

    fwd = jax.jit(lambda xx, tt, zz: diffusion_mlp_forward(params, xx, tt, zz))
    out = jax.block_until_ready(fwd(x, timestep, z))

    ref = reference_forward(params, x, timestep, z)
    assert out.shape == (B, N, patch_size ** 2 * C), out.shape
    assert jnp.allclose(out, ref, atol=2e-3, rtol=2e-3), \
        float(jnp.max(jnp.abs(out - ref)))
    print("KERNEL_OK")
</pallas_src>

<mosaic_0001>
module attributes {stable_mosaic.version = 11 : i64} {
  func.func @_fused_kernel(%arg0: i32, %arg1: i32, %arg2: memref<64x16xbf16, #tpu.memory_space<vmem>>, %arg3: memref<64x16xbf16, #tpu.memory_space<vmem>>, %arg4: memref<64x32xf32, #tpu.memory_space<vmem>>, %arg5: memref<16x32xbf16, #tpu.memory_space<vmem>>, %arg6: memref<1x32xf32, #tpu.memory_space<vmem>>, %arg7: memref<16x32xbf16, #tpu.memory_space<vmem>>, %arg8: memref<1x32xf32, #tpu.memory_space<vmem>>, %arg9: memref<32x32xbf16, #tpu.memory_space<vmem>>, %arg10: memref<1x32xf32, #tpu.memory_space<vmem>>, %arg11: memref<32x256xbf16, #tpu.memory_space<vmem>>, %arg12: memref<1x256xf32, #tpu.memory_space<vmem>>, %arg13: memref<32x64xbf16, #tpu.memory_space<vmem>>, %arg14: memref<1x64xf32, #tpu.memory_space<vmem>>, %arg15: memref<1x32x64xbf16, #tpu.memory_space<vmem>>, %arg16: memref<1x32x32xbf16, #tpu.memory_space<vmem>>, %arg17: memref<1x32x32xbf16, #tpu.memory_space<vmem>>, %arg18: memref<1x32x32xbf16, #tpu.memory_space<vmem>>, %arg19: memref<1x8x32xf32, #tpu.memory_space<vmem>>, %arg20: memref<64x256xf32, #tpu.memory_space<vmem>>, %arg21: memref<64x32xf32, #tpu.memory_space<vmem>>, %arg22: memref<64x32xbf16, #tpu.memory_space<vmem>>) attributes {dimension_semantics = [#tpu.dimension_semantics<parallel>, #tpu.dimension_semantics<arbitrary>], iteration_bounds = array<i64: 2, 2>, scalar_prefetch = 0 : i64, scratch_operands = 2 : i64, tpu.core_type = #tpu.core_type<tc>, window_params = [{transform_indices = @transform_0, window_bounds = array<i64: 64, 16>}, {transform_indices = @transform_1, window_bounds = array<i64: 64, 16>}, {transform_indices = @transform_2, window_bounds = array<i64: 64, 32>}, {pipeline_mode = #tpu.pipeline_mode<synchronous>, transform_indices = @transform_3, window_bounds = array<i64: 16, 32>}, {pipeline_mode = #tpu.pipeline_mode<synchronous>, transform_indices = @transform_4, window_bounds = array<i64: 1, 32>}, {pipeline_mode = #tpu.pipeline_mode<synchronous>, transform_indices = @transform_5, window_bounds = array<i64: 16, 32>}, {pipeline_mode = #tpu.pipeline_mode<synchronous>, transform_indices = @transform_6, window_bounds = array<i64: 1, 32>}, {pipeline_mode = #tpu.pipeline_mode<synchronous>, transform_indices = @transform_7, window_bounds = array<i64: 32, 32>}, {pipeline_mode = #tpu.pipeline_mode<synchronous>, transform_indices = @transform_8, window_bounds = array<i64: 1, 32>}, {pipeline_mode = #tpu.pipeline_mode<synchronous>, transform_indices = @transform_9, window_bounds = array<i64: 32, 256>}, {pipeline_mode = #tpu.pipeline_mode<synchronous>, transform_indices = @transform_10, window_bounds = array<i64: 1, 256>}, {pipeline_mode = #tpu.pipeline_mode<synchronous>, transform_indices = @transform_11, window_bounds = array<i64: 32, 64>}, {pipeline_mode = #tpu.pipeline_mode<synchronous>, transform_indices = @transform_12, window_bounds = array<i64: 1, 64>}, {transform_indices = @transform_13, window_bounds = array<i64: 1, 32, 64>}, {transform_indices = @transform_14, window_bounds = array<i64: 1, 32, 32>}, {transform_indices = @transform_15, window_bounds = array<i64: 1, 32, 32>}, {transform_indices = @transform_16, window_bounds = array<i64: 1, 32, 32>}, {transform_indices = @transform_17, window_bounds = array<i64: 1, 8, 32>}, {transform_indices = @transform_18, window_bounds = array<i64: 64, 256>}]} {
    %c0_i32 = arith.constant 0 : i32
    %0 = arith.cmpi eq, %arg1, %c0_i32 : i32
    %1 = arith.extui %0 : i1 to i32
    %c0_i32_0 = arith.constant 0 : i32
    %2 = arith.cmpi ne, %1, %c0_i32_0 : i32
    scf.if %2 {
      %c0_37 = arith.constant 0 : index
      %c0_38 = arith.constant 0 : index
      %92 = vector.load %arg2[%c0_37, %c0_38] : memref<64x16xbf16, #tpu.memory_space<vmem>>, vector<64x16xbf16>
      %c0_39 = arith.constant 0 : index
      %c0_40 = arith.constant 0 : index
      %93 = vector.load %arg5[%c0_39, %c0_40] : memref<16x32xbf16, #tpu.memory_space<vmem>>, vector<16x32xbf16>
      %cst_41 = arith.constant dense<0.000000e+00> : vector<64x32xf32>
      %94 = tpu.matmul %92, %93, %cst_41 {dimension_numbers = #tpu.dot_dimension_numbers<[1], [0], [0], [1], [0, 0, 1, 1], [], []>} : vector<64x16xbf16>, vector<16x32xbf16>, vector<64x32xf32> -> vector<64x32xf32>
      %c0_42 = arith.constant 0 : index
      %c0_43 = arith.constant 0 : index
      %95 = vector.load %arg6[%c0_42, %c0_43] : memref<1x32xf32, #tpu.memory_space<vmem>>, vector<1x32xf32>
      %96 = vector.broadcast %95 : vector<1x32xf32> to vector<64x32xf32>
      %97 = arith.addf %94, %96 : vector<64x32xf32>
      %c0_44 = arith.constant 0 : index
      %c0_45 = arith.constant 0 : index
      %98 = vector.load %arg21[%c0_44, %c0_45] : memref<64x32xf32, #tpu.memory_space<vmem>>, vector<64x32xf32>
      tpu.vector_store %arg21[%c0_44, %c0_45], %97 {strides = array<i32>} : memref<64x32xf32, #tpu.memory_space<vmem>>, vector<64x32xf32>,
      %c0_46 = arith.constant 0 : index
      %c0_47 = arith.constant 0 : index
      %99 = vector.load %arg3[%c0_46, %c0_47] : memref<64x16xbf16, #tpu.memory_space<vmem>>, vector<64x16xbf16>
      %c0_48 = arith.constant 0 : index
      %c0_49 = arith.constant 0 : index
      %100 = vector.load %arg7[%c0_48, %c0_49] : memref<16x32xbf16, #tpu.memory_space<vmem>>, vector<16x32xbf16>
      %cst_50 = arith.constant dense<0.000000e+00> : vector<64x32xf32>
      %101 = tpu.matmul %99, %100, %cst_50 {dimension_numbers = #tpu.dot_dimension_numbers<[1], [0], [0], [1], [0, 0, 1, 1], [], []>} : vector<64x16xbf16>, vector<16x32xbf16>, vector<64x32xf32> -> vector<64x32xf32>
      %c0_51 = arith.constant 0 : index
      %c0_52 = arith.constant 0 : index
      %102 = vector.load %arg8[%c0_51, %c0_52] : memref<1x32xf32, #tpu.memory_space<vmem>>, vector<1x32xf32>
      %103 = vector.broadcast %102 : vector<1x32xf32> to vector<64x32xf32>
      %104 = arith.addf %101, %103 : vector<64x32xf32>
      %105 = arith.negf %104 : vector<64x32xf32>
      %106 = math.exp %105 : vector<64x32xf32>
      %cst_53 = arith.constant 1.000000e+00 : f32
      %107 = vector.broadcast %cst_53 : f32 to vector<64x32xf32>
      %108 = arith.addf %107, %106 : vector<64x32xf32>
      %109 = arith.divf %107, %108 : vector<64x32xf32>
      %110 = arith.mulf %104, %109 : vector<64x32xf32>
      %111 = arith.truncf %110 : vector<64x32xf32> to vector<64x32xbf16>
      %c0_54 = arith.constant 0 : index
      %c0_55 = arith.constant 0 : index
      %112 = vector.load %arg9[%c0_54, %c0_55] : memref<32x32xbf16, #tpu.memory_space<vmem>>, vector<32x32xbf16>
      %cst_56 = arith.constant dense<0.000000e+00> : vector<64x32xf32>
      %113 = tpu.matmul %111, %112, %cst_56 {dimension_numbers = #tpu.dot_dimension_numbers<[1], [0], [0], [1], [0, 0, 1, 1], [], []>} : vector<64x32xbf16>, vector<32x32xbf16>, vector<64x32xf32> -> vector<64x32xf32>
      %c0_57 = arith.constant 0 : index
      %c0_58 = arith.constant 0 : index
      %114 = vector.load %arg10[%c0_57, %c0_58] : memref<1x32xf32, #tpu.memory_space<vmem>>, vector<1x32xf32>
      %115 = vector.broadcast %114 : vector<1x32xf32> to vector<64x32xf32>
      %116 = arith.addf %113, %115 : vector<64x32xf32>
      %c0_59 = arith.constant 0 : index
      %c0_60 = arith.constant 0 : index
      %117 = vector.load %arg4[%c0_59, %c0_60] : memref<64x32xf32, #tpu.memory_space<vmem>>, vector<64x32xf32>
      %118 = arith.addf %116, %117 : vector<64x32xf32>
      %119 = arith.negf %118 : vector<64x32xf32>
      %120 = math.exp %119 : vector<64x32xf32>
      %cst_61 = arith.constant 1.000000e+00 : f32
      %121 = vector.broadcast %cst_61 : f32 to vector<64x32xf32>
      %122 = arith.addf %121, %120 : vector<64x32xf32>
      %123 = arith.divf %121, %122 : vector<64x32xf32>
      %124 = arith.mulf %118, %123 : vector<64x32xf32>
      %125 = arith.truncf %124 : vector<64x32xf32> to vector<64x32xbf16>
      %c0_62 = arith.constant 0 : index
      %c0_63 = arith.constant 0 : index
      %126 = vector.load %arg22[%c0_62, %c0_63] : memref<64x32xbf16, #tpu.memory_space<vmem>>, vector<64x32xbf16>
      tpu.vector_store %arg22[%c0_62, %c0_63], %125 {strides = array<i32>} : memref<64x32xbf16, #tpu.memory_space<vmem>>, vector<64x32xbf16>,
    } else {
    }
    %c0 = arith.constant 0 : index
    %c0_1 = arith.constant 0 : index
    %3 = vector.load %arg22[%c0, %c0_1] : memref<64x32xbf16, #tpu.memory_space<vmem>>, vector<64x32xbf16>
    %c0_2 = arith.constant 0 : index
    %c0_3 = arith.constant 0 : index
    %4 = vector.load %arg21[%c0_2, %c0_3] : memref<64x32xf32, #tpu.memory_space<vmem>>, vector<64x32xf32>
    %c0_4 = arith.constant 0 : index
    %c0_5 = arith.constant 0 : index
    %c0_6 = arith.constant 0 : index
    %5 = vector.load %arg19[%c0_4, %c0_5, %c0_6] : memref<1x8x32xf32, #tpu.memory_space<vmem>>, vector<1x8x32xf32>
    %6 = vector.shape_cast %5 : vector<1x8x32xf32> to vector<8x32xf32>
    %c0_7 = arith.constant 0 : index
    %c0_8 = arith.constant 0 : index
    %c0_9 = arith.constant 0 : index
    %7 = vector.load %arg15[%c0_7, %c0_8, %c0_9] : memref<1x32x64xbf16, #tpu.memory_space<vmem>>, vector<1x32x64xbf16>
    %8 = vector.shape_cast %7 : vector<1x32x64xbf16> to vector<32x64xbf16>
    %cst = arith.constant dense<0.000000e+00> : vector<64x64xf32>
    %9 = tpu.matmul %3, %8, %cst {dimension_numbers = #tpu.dot_dimension_numbers<[1], [0], [0], [1], [0, 0, 1, 1], [], []>} : vector<64x32xbf16>, vector<32x64xbf16>, vector<64x64xf32> -> vector<64x64xf32>
    %10 = vector.extract_strided_slice %9 {offsets = [0, 0], sizes = [64, 32], strides = [1, 1]} : vector<64x64xf32> to vector<64x32xf32>
    %11 = vector.extract_strided_slice %6 {offsets = [0, 0], sizes = [1, 32], strides = [1, 1]} : vector<8x32xf32> to vector<1x32xf32>
    %12 = vector.broadcast %11 : vector<1x32xf32> to vector<64x32xf32>
    %13 = arith.addf %10, %12 : vector<64x32xf32>
    %14 = vector.extract_strided_slice %9 {offsets = [0, 32], sizes = [64, 32], strides = [1, 1]} : vector<64x64xf32> to vector<64x32xf32>
    %15 = vector.extract_strided_slice %6 {offsets = [1, 0], sizes = [1, 32], strides = [1, 1]} : vector<8x32xf32> to vector<1x32xf32>
    %16 = vector.broadcast %15 : vector<1x32xf32> to vector<64x32xf32>
    %17 = arith.addf %14, %16 : vector<64x32xf32>
    %cst_10 = arith.constant dense<0.000000e+00> : vector<64xf32>
    %18 = vector.multi_reduction <add>, %4, %cst_10 [1] : vector<64x32xf32> to vector<64xf32>
    %19 = vector.shape_cast %18 : vector<64xf32> to vector<64x1xf32>
    %cst_11 = arith.constant 3.200000e+01 : f32
    %20 = vector.broadcast %cst_11 : f32 to vector<64x1xf32>
    %21 = arith.divf %19, %20 : vector<64x1xf32>
    %22 = vector.broadcast %21 : vector<64x1xf32> to vector<64x32xf32>
    %23 = arith.subf %4, %22 : vector<64x32xf32>
    %24 = arith.mulf %23, %23 : vector<64x32xf32>
    %cst_12 = arith.constant dense<0.000000e+00> : vector<64xf32>
    %25 = vector.multi_reduction <add>, %24, %cst_12 [1] : vector<64x32xf32> to vector<64xf32>
    %26 = vector.shape_cast %25 : vector<64xf32> to vector<64x1xf32>
    %cst_13 = arith.constant 3.200000e+01 : f32
    %27 = vector.broadcast %cst_13 : f32 to vector<64x1xf32>
    %28 = arith.divf %26, %27 : vector<64x1xf32>
    %cst_14 = arith.constant 9.99999997E-7 : f32
    %29 = vector.broadcast %cst_14 : f32 to vector<64x1xf32>
    %30 = arith.addf %28, %29 : vector<64x1xf32>
    %31 = math.rsqrt %30 : vector<64x1xf32>
    %32 = vector.broadcast %31 : vector<64x1xf32> to vector<64x32xf32>
    %33 = arith.mulf %23, %32 : vector<64x32xf32>
    %cst_15 = arith.constant 1.000000e+00 : f32
    %34 = vector.broadcast %cst_15 : f32 to vector<64x32xf32>
    %35 = arith.addf %34, %17 : vector<64x32xf32>
    %36 = arith.mulf %33, %35 : vector<64x32xf32>
    %37 = arith.addf %36, %13 : vector<64x32xf32>
    %38 = arith.truncf %37 : vector<64x32xf32> to vector<64x32xbf16>
    %c0_16 = arith.constant 0 : index
    %c0_17 = arith.constant 0 : index
    %c0_18 = arith.constant 0 : index
    %39 = vector.load %arg17[%c0_16, %c0_17, %c0_18] : memref<1x32x32xbf16, #tpu.memory_space<vmem>>, vector<1x32x32xbf16>
    %40 = vector.shape_cast %39 : vector<1x32x32xbf16> to vector<32x32xbf16>
    %cst_19 = arith.constant dense<0.000000e+00> : vector<64x32xf32>
    %41 = tpu.matmul %38, %40, %cst_19 {dimension_numbers = #tpu.dot_dimension_numbers<[1], [0], [0], [1], [0, 0, 1, 1], [], []>} : vector<64x32xbf16>, vector<32x32xbf16>, vector<64x32xf32> -> vector<64x32xf32>
    %42 = vector.extract_strided_slice %6 {offsets = [3, 0], sizes = [1, 32], strides = [1, 1]} : vector<8x32xf32> to vector<1x32xf32>
    %43 = vector.broadcast %42 : vector<1x32xf32> to vector<64x32xf32>
    %44 = arith.addf %41, %43 : vector<64x32xf32>
    %45 = arith.negf %44 : vector<64x32xf32>
    %46 = math.exp %45 : vector<64x32xf32>
    %cst_20 = arith.constant 1.000000e+00 : f32
    %47 = vector.broadcast %cst_20 : f32 to vector<64x32xf32>
    %48 = arith.addf %47, %46 : vector<64x32xf32>
    %49 = arith.divf %47, %48 : vector<64x32xf32>
    %50 = arith.mulf %44, %49 : vector<64x32xf32>
    %51 = arith.truncf %50 : vector<64x32xf32> to vector<64x32xbf16>
    %c0_21 = arith.constant 0 : index
    %c0_22 = arith.constant 0 : index
    %c0_23 = arith.constant 0 : index
    %52 = vector.load %arg18[%c0_21, %c0_22, %c0_23] : memref<1x32x32xbf16, #tpu.memory_space<vmem>>, vector<1x32x32xbf16>
    %53 = vector.shape_cast %52 : vector<1x32x32xbf16> to vector<32x32xbf16>
    %cst_24 = arith.constant dense<0.000000e+00> : vector<64x32xf32>
    %54 = tpu.matmul %51, %53, %cst_24 {dimension_numbers = #tpu.dot_dimension_numbers<[1], [0], [0], [1], [0, 0, 1, 1], [], []>} : vector<64x32xbf16>, vector<32x32xbf16>, vector<64x32xf32> -> vector<64x32xf32>
    %55 = vector.extract_strided_slice %6 {offsets = [4, 0], sizes = [1, 32], strides = [1, 1]} : vector<8x32xf32> to vector<1x32xf32>
    %56 = vector.broadcast %55 : vector<1x32xf32> to vector<64x32xf32>
    %57 = arith.addf %54, %56 : vector<64x32xf32>
    %cst_25 = arith.constant dense<0.000000e+00> : vector<64xf32>
    %58 = vector.multi_reduction <add>, %57, %cst_25 [1] : vector<64x32xf32> to vector<64xf32>
    %59 = vector.shape_cast %58 : vector<64xf32> to vector<64x1xf32>
    %cst_26 = arith.constant 3.200000e+01 : f32
    %60 = vector.broadcast %cst_26 : f32 to vector<64x1xf32>
    %61 = arith.divf %59, %60 : vector<64x1xf32>
    %62 = vector.broadcast %61 : vector<64x1xf32> to vector<64x32xf32>
    %63 = arith.subf %57, %62 : vector<64x32xf32>
    %64 = arith.mulf %63, %63 : vector<64x32xf32>
    %cst_27 = arith.constant dense<0.000000e+00> : vector<64xf32>
    %65 = vector.multi_reduction <add>, %64, %cst_27 [1] : vector<64x32xf32> to vector<64xf32>
    %66 = vector.shape_cast %65 : vector<64xf32> to vector<64x1xf32>
    %cst_28 = arith.constant 3.200000e+01 : f32
    %67 = vector.broadcast %cst_28 : f32 to vector<64x1xf32>
    %68 = arith.divf %66, %67 : vector<64x1xf32>
    %cst_29 = arith.constant 9.99999974E-6 : f32
    %69 = vector.broadcast %cst_29 : f32 to vector<64x1xf32>
    %70 = arith.addf %68, %69 : vector<64x1xf32>
    %71 = math.rsqrt %70 : vector<64x1xf32>
    %72 = vector.broadcast %71 : vector<64x1xf32> to vector<64x32xf32>
    %73 = arith.mulf %63, %72 : vector<64x32xf32>
    %74 = vector.extract_strided_slice %6 {offsets = [5, 0], sizes = [1, 32], strides = [1, 1]} : vector<8x32xf32> to vector<1x32xf32>
    %75 = vector.broadcast %74 : vector<1x32xf32> to vector<64x32xf32>
    %76 = arith.mulf %73, %75 : vector<64x32xf32>
    %77 = vector.extract_strided_slice %6 {offsets = [6, 0], sizes = [1, 32], strides = [1, 1]} : vector<8x32xf32> to vector<1x32xf32>
    %78 = vector.broadcast %77 : vector<1x32xf32> to vector<64x32xf32>
    %79 = arith.addf %76, %78 : vector<64x32xf32>
    %c0_30 = arith.constant 0 : index
    %c0_31 = arith.constant 0 : index
    %c0_32 = arith.constant 0 : index
    %80 = vector.load %arg16[%c0_30, %c0_31, %c0_32] : memref<1x32x32xbf16, #tpu.memory_space<vmem>>, vector<1x32x32xbf16>
    %81 = vector.shape_cast %80 : vector<1x32x32xbf16> to vector<32x32xbf16>
    %cst_33 = arith.constant dense<0.000000e+00> : vector<64x32xf32>
    %82 = tpu.matmul %3, %81, %cst_33 {dimension_numbers = #tpu.dot_dimension_numbers<[1], [0], [0], [1], [0, 0, 1, 1], [], []>} : vector<64x32xbf16>, vector<32x32xbf16>, vector<64x32xf32> -> vector<64x32xf32>
    %83 = vector.extract_strided_slice %6 {offsets = [2, 0], sizes = [1, 32], strides = [1, 1]} : vector<8x32xf32> to vector<1x32xf32>
    %84 = vector.broadcast %83 : vector<1x32xf32> to vector<64x32xf32>
    %85 = arith.addf %82, %84 : vector<64x32xf32>
    %86 = arith.mulf %79, %85 : vector<64x32xf32>
    %87 = arith.addf %86, %4 : vector<64x32xf32>
    %c0_34 = arith.constant 0 : index
    %c0_35 = arith.constant 0 : index
    %88 = vector.load %arg21[%c0_34, %c0_35] : memref<64x32xf32, #tpu.memory_space<vmem>>, vector<64x32xf32>
    tpu.vector_store %arg21[%c0_34, %c0_35], %87 {strides = array<i32>} : memref<64x32xf32, #tpu.memory_space<vmem>>, vector<64x32xf32>,
    %c1_i32 = arith.constant 1 : i32
    %89 = arith.cmpi eq, %arg1, %c1_i32 : i32
    %90 = arith.extui %89 : i1 to i32
    %c0_i32_36 = arith.constant 0 : i32
    %91 = arith.cmpi ne, %90, %c0_i32_36 : i32
    scf.if %91 {
      %c0_37 = arith.constant 0 : index
      %c0_38 = arith.constant 0 : index
      %92 = vector.load %arg13[%c0_37, %c0_38] : memref<32x64xbf16, #tpu.memory_space<vmem>>, vector<32x64xbf16>
      %cst_39 = arith.constant dense<0.000000e+00> : vector<64x64xf32>
      %93 = tpu.matmul %3, %92, %cst_39 {dimension_numbers = #tpu.dot_dimension_numbers<[1], [0], [0], [1], [0, 0, 1, 1], [], []>} : vector<64x32xbf16>, vector<32x64xbf16>, vector<64x64xf32> -> vector<64x64xf32>
      %c0_40 = arith.constant 0 : index
      %c0_41 = arith.constant 0 : index
      %94 = vector.load %arg14[%c0_40, %c0_41] : memref<1x64xf32, #tpu.memory_space<vmem>>, vector<1x64xf32>
      %95 = vector.broadcast %94 : vector<1x64xf32> to vector<64x64xf32>
      %96 = arith.addf %93, %95 : vector<64x64xf32>
      %cst_42 = arith.constant dense<0.000000e+00> : vector<64xf32>
      %97 = vector.multi_reduction <add>, %87, %cst_42 [1] : vector<64x32xf32> to vector<64xf32>
      %98 = vector.shape_cast %97 : vector<64xf32> to vector<64x1xf32>
      %cst_43 = arith.constant 3.200000e+01 : f32
      %99 = vector.broadcast %cst_43 : f32 to vector<64x1xf32>
      %100 = arith.divf %98, %99 : vector<64x1xf32>
      %101 = vector.broadcast %100 : vector<64x1xf32> to vector<64x32xf32>
      %102 = arith.subf %87, %101 : vector<64x32xf32>
      %103 = arith.mulf %102, %102 : vector<64x32xf32>
      %cst_44 = arith.constant dense<0.000000e+00> : vector<64xf32>
      %104 = vector.multi_reduction <add>, %103, %cst_44 [1] : vector<64x32xf32> to vector<64xf32>
      %105 = vector.shape_cast %104 : vector<64xf32> to vector<64x1xf32>
      %cst_45 = arith.constant 3.200000e+01 : f32
      %106 = vector.broadcast %cst_45 : f32 to vector<64x1xf32>
      %107 = arith.divf %105, %106 : vector<64x1xf32>
      %cst_46 = arith.constant 9.99999997E-7 : f32
      %108 = vector.broadcast %cst_46 : f32 to vector<64x1xf32>
      %109 = arith.addf %107, %108 : vector<64x1xf32>
      %110 = math.rsqrt %109 : vector<64x1xf32>
      %111 = vector.broadcast %110 : vector<64x1xf32> to vector<64x32xf32>
      %112 = arith.mulf %102, %111 : vector<64x32xf32>
      %113 = vector.extract_strided_slice %96 {offsets = [0, 32], sizes = [64, 32], strides = [1, 1]} : vector<64x64xf32> to vector<64x32xf32>
      %cst_47 = arith.constant 1.000000e+00 : f32
      %114 = vector.broadcast %cst_47 : f32 to vector<64x32xf32>
      %115 = arith.addf %114, %113 : vector<64x32xf32>
      %116 = arith.mulf %112, %115 : vector<64x32xf32>
      %117 = vector.extract_strided_slice %96 {offsets = [0, 0], sizes = [64, 32], strides = [1, 1]} : vector<64x64xf32> to vector<64x32xf32>
      %118 = arith.addf %116, %117 : vector<64x32xf32>
      %119 = arith.truncf %118 : vector<64x32xf32> to vector<64x32xbf16>
      %c0_48 = arith.constant 0 : index
      %c0_49 = arith.constant 0 : index
      %120 = vector.load %arg11[%c0_48, %c0_49] : memref<32x256xbf16, #tpu.memory_space<vmem>>, vector<32x256xbf16>
      %cst_50 = arith.constant dense<0.000000e+00> : vector<64x256xf32>
      %121 = tpu.matmul %119, %120, %cst_50 {dimension_numbers = #tpu.dot_dimension_numbers<[1], [0], [0], [1], [0, 0, 1, 1], [], []>} : vector<64x32xbf16>, vector<32x256xbf16>, vector<64x256xf32> -> vector<64x256xf32>
      %c0_51 = arith.constant 0 : index
      %c0_52 = arith.constant 0 : index
      %122 = vector.load %arg12[%c0_51, %c0_52] : memref<1x256xf32, #tpu.memory_space<vmem>>, vector<1x256xf32>
      %123 = vector.broadcast %122 : vector<1x256xf32> to vector<64x256xf32>
      %124 = arith.addf %121, %123 : vector<64x256xf32>
      %c0_53 = arith.constant 0 : index
      %c0_54 = arith.constant 0 : index
      %125 = vector.load %arg20[%c0_53, %c0_54] : memref<64x256xf32, #tpu.memory_space<vmem>>, vector<64x256xf32>
      tpu.vector_store %arg20[%c0_53, %c0_54], %124 {strides = array<i32>} : memref<64x256xf32, #tpu.memory_space<vmem>>, vector<64x256xf32>,
    } else {
    }
    return
  }
  func.func @transform_0(%arg0: i32, %arg1: i32) -> (i32, i32) {
    %c0_i32 = arith.constant 0 : i32
    %c0_i32_0 = arith.constant 0 : i32
    return %arg0, %c0_i32 : i32, i32
  }
  func.func @transform_1(%arg0: i32, %arg1: i32) -> (i32, i32) {
    %c0_i32 = arith.constant 0 : i32
    %c0_i32_0 = arith.constant 0 : i32
    return %arg0, %c0_i32 : i32, i32
  }
  func.func @transform_2(%arg0: i32, %arg1: i32) -> (i32, i32) {
    %c0_i32 = arith.constant 0 : i32
    %c0_i32_0 = arith.constant 0 : i32
    return %arg0, %c0_i32 : i32, i32
  }
  func.func @transform_3(%arg0: i32, %arg1: i32) -> (i32, i32) {
    %c0_i32 = arith.constant 0 : i32
    %c0_i32_0 = arith.constant 0 : i32
    %c0_i32_1 = arith.constant 0 : i32
    return %c0_i32, %c0_i32_0 : i32, i32
  }
  func.func @transform_4(%arg0: i32, %arg1: i32) -> (i32, i32) {
    %c0_i32 = arith.constant 0 : i32
    %c0_i32_0 = arith.constant 0 : i32
    %c0_i32_1 = arith.constant 0 : i32
    return %c0_i32, %c0_i32_0 : i32, i32
  }
  func.func @transform_5(%arg0: i32, %arg1: i32) -> (i32, i32) {
    %c0_i32 = arith.constant 0 : i32
    %c0_i32_0 = arith.constant 0 : i32
    %c0_i32_1 = arith.constant 0 : i32
    return %c0_i32, %c0_i32_0 : i32, i32
  }
  func.func @transform_6(%arg0: i32, %arg1: i32) -> (i32, i32) {
    %c0_i32 = arith.constant 0 : i32
    %c0_i32_0 = arith.constant 0 : i32
    %c0_i32_1 = arith.constant 0 : i32
    return %c0_i32, %c0_i32_0 : i32, i32
  }
  func.func @transform_7(%arg0: i32, %arg1: i32) -> (i32, i32) {
    %c0_i32 = arith.constant 0 : i32
    %c0_i32_0 = arith.constant 0 : i32
    %c0_i32_1 = arith.constant 0 : i32
    return %c0_i32, %c0_i32_0 : i32, i32
  }
  func.func @transform_8(%arg0: i32, %arg1: i32) -> (i32, i32) {
    %c0_i32 = arith.constant 0 : i32
    %c0_i32_0 = arith.constant 0 : i32
    %c0_i32_1 = arith.constant 0 : i32
    return %c0_i32, %c0_i32_0 : i32, i32
  }
  func.func @transform_9(%arg0: i32, %arg1: i32) -> (i32, i32) {
    %c0_i32 = arith.constant 0 : i32
    %c0_i32_0 = arith.constant 0 : i32
    %c0_i32_1 = arith.constant 0 : i32
    return %c0_i32, %c0_i32_0 : i32, i32
  }
  func.func @transform_10(%arg0: i32, %arg1: i32) -> (i32, i32) {
    %c0_i32 = arith.constant 0 : i32
    %c0_i32_0 = arith.constant 0 : i32
    %c0_i32_1 = arith.constant 0 : i32
    return %c0_i32, %c0_i32_0 : i32, i32
  }
  func.func @transform_11(%arg0: i32, %arg1: i32) -> (i32, i32) {
    %c0_i32 = arith.constant 0 : i32
    %c0_i32_0 = arith.constant 0 : i32
    %c0_i32_1 = arith.constant 0 : i32
    return %c0_i32, %c0_i32_0 : i32, i32
  }
  func.func @transform_12(%arg0: i32, %arg1: i32) -> (i32, i32) {
    %c0_i32 = arith.constant 0 : i32
    %c0_i32_0 = arith.constant 0 : i32
    %c0_i32_1 = arith.constant 0 : i32
    return %c0_i32, %c0_i32_0 : i32, i32
  }
  func.func @transform_13(%arg0: i32, %arg1: i32) -> (i32, i32, i32) {
    %c0_i32 = arith.constant 0 : i32
    %c0_i32_0 = arith.constant 0 : i32
    %c0_i32_1 = arith.constant 0 : i32
    return %arg1, %c0_i32, %c0_i32_0 : i32, i32, i32
  }
  func.func @transform_14(%arg0: i32, %arg1: i32) -> (i32, i32, i32) {
    %c0_i32 = arith.constant 0 : i32
    %c0_i32_0 = arith.constant 0 : i32
    %c0_i32_1 = arith.constant 0 : i32
    return %arg1, %c0_i32, %c0_i32_0 : i32, i32, i32
  }
  func.func @transform_15(%arg0: i32, %arg1: i32) -> (i32, i32, i32) {
    %c0_i32 = arith.constant 0 : i32
    %c0_i32_0 = arith.constant 0 : i32
    %c0_i32_1 = arith.constant 0 : i32
    return %arg1, %c0_i32, %c0_i32_0 : i32, i32, i32
  }
  func.func @transform_16(%arg0: i32, %arg1: i32) -> (i32, i32, i32) {
    %c0_i32 = arith.constant 0 : i32
    %c0_i32_0 = arith.constant 0 : i32
    %c0_i32_1 = arith.constant 0 : i32
    return %arg1, %c0_i32, %c0_i32_0 : i32, i32, i32
  }
  func.func @transform_17(%arg0: i32, %arg1: i32) -> (i32, i32, i32) {
    %c0_i32 = arith.constant 0 : i32
    %c0_i32_0 = arith.constant 0 : i32
    %c0_i32_1 = arith.constant 0 : i32
    return %arg1, %c0_i32, %c0_i32_0 : i32, i32, i32
  }
  func.func @transform_18(%arg0: i32, %arg1: i32) -> (i32, i32) {
    %c0_i32 = arith.constant 0 : i32
    %c0_i32_0 = arith.constant 0 : i32
    return %arg0, %c0_i32 : i32, i32
  }
}

</mosaic_0001>

<llo_original>
// kernel: _lambda_.1
$region0: #{_lambda_.1}
  #allocation0 [shape = 'u32[]', space=smem, size = 0x4, offset = 0x4, fixed_abs, tag = 'smem constant byte address 0x4 - core index']
  #allocation1 [shape = 'u32[144,128]{1,0:T(1,128)}', space=vmem, size = 0x12000, scoped, tag = 'internal scratch']
  #allocation2 [shape = 'f32[64,32]{1,0:T(8,128)}', space=vmem, size = 0x8000, scoped, tag = 'scratch operand']
  #allocation3 [shape = 'bf16[64,32]{1,0:T(8,128)(2,1)}', space=vmem, size = 0x4000, scoped, tag = 'scratch operand']
  %s0 = inlined_call_operand.vmem [shape: bf16[128,16], index: 0, kind: input, shape index: {}]
  %s1 = inlined_call_operand.vmem [shape: bf16[128,16], index: 1, kind: input, shape index: {}]
  %s2 = inlined_call_operand.vmem [shape: f32[128,32], index: 2, kind: input, shape index: {}]
  %s3 = inlined_call_operand.vmem [shape: bf16[16,32], index: 3, kind: input, shape index: {}]
  %s4 = inlined_call_operand.vmem [shape: f32[1,32], index: 4, kind: input, shape index: {}]
  %s5 = inlined_call_operand.vmem [shape: bf16[16,32], index: 5, kind: input, shape index: {}]
  %s6 = inlined_call_operand.vmem [shape: f32[1,32], index: 6, kind: input, shape index: {}]
  %s7 = inlined_call_operand.vmem [shape: bf16[32,32], index: 7, kind: input, shape index: {}]
  %s8 = inlined_call_operand.vmem [shape: f32[1,32], index: 8, kind: input, shape index: {}]
  %s9 = inlined_call_operand.vmem [shape: bf16[32,256], index: 9, kind: input, shape index: {}]
  %s10 = inlined_call_operand.vmem [shape: f32[1,256], index: 10, kind: input, shape index: {}]
  %s11 = inlined_call_operand.vmem [shape: bf16[32,64], index: 11, kind: input, shape index: {}]
  %s12 = inlined_call_operand.vmem [shape: f32[1,64], index: 12, kind: input, shape index: {}]
  %s13 = inlined_call_operand.vmem [shape: bf16[2,32,64], index: 13, kind: input, shape index: {}]
  %s14 = inlined_call_operand.vmem [shape: bf16[2,32,32], index: 14, kind: input, shape index: {}]
  %s15 = inlined_call_operand.vmem [shape: bf16[2,32,32], index: 15, kind: input, shape index: {}]
  %s16 = inlined_call_operand.vmem [shape: bf16[2,32,32], index: 16, kind: input, shape index: {}]
  %s17 = inlined_call_operand.vmem [shape: f32[2,8,32], index: 17, kind: input, shape index: {}]
  %s18 = inlined_call_operand.vmem [shape: f32[128,256], index: 18, kind: output, shape index: {}]
  %s19 = sld [smem:[#allocation0]]
  $region113: #{_lambda_.1} parent=0
    _
  %s21 = ssub.s32 1, %s19
  %s22 = scalar_select 0, %s21, %s19
  loop: start=0, step=1, limit=6
  $region2: #{_lambda_.1} parent=0 // loop_pre_header
    _
  $region3: #{_lambda_.1} parent=0 // loop_header
    %s24 = sphi 0, %s28
    %p25 = scmp.ge.s32.totalorder %s24, 6
    %s31 = sphi 0, %s43
    %s32 = sphi 0, %s39
    %s33 = sphi 0, %s31
    %s34 = sphi 0, %s32
    %s35 = sphi 0, %s33
    %s36 = sphi 0, %s34
    %s46 = sphi 0, %s48
    %s49 = sphi 0, %s46
    %s50 = sphi 0, %s49
    %s66 = sphi 0, %s50
    %s72 = sphi 0, %s74
    %s75 = sphi 0, %s72
    %s76 = sphi 0, %s75
    %s92 = sphi 0, %s76
    %s98 = sphi 0, %s100
    %s101 = sphi 0, %s98
    %s102 = sphi 0, %s101
    %s118 = sphi 0, %s102
    %s122 = sphi 0, %s122
    %s124 = sphi 0, %s122
    %s125 = sphi 0, %s124
    %s139 = sphi 0, %s125
    %s143 = sphi 0, %s143
    %s145 = sphi 0, %s143
    %s146 = sphi 0, %s145
    %s160 = sphi 0, %s146
    %s164 = sphi 0, %s164
    %s166 = sphi 0, %s164
    %s167 = sphi 0, %s166
    %s181 = sphi 0, %s167
    %s185 = sphi 0, %s185
    %s187 = sphi 0, %s185
    %s188 = sphi 0, %s187
    %s202 = sphi 0, %s188
    %s206 = sphi 0, %s206
    %s208 = sphi 0, %s206
    %s209 = sphi 0, %s208
    %s223 = sphi 0, %s209
    %s227 = sphi 0, %s227
    %s229 = sphi 0, %s227
    %s230 = sphi 0, %s229
    %s244 = sphi 0, %s230
    %s248 = sphi 0, %s248
    %s250 = sphi 0, %s248
    %s251 = sphi 0, %s250
    %s265 = sphi 0, %s251
    %s269 = sphi 0, %s269
    %s271 = sphi 0, %s269
    %s272 = sphi 0, %s271
    %s286 = sphi 0, %s272
    %s290 = sphi 0, %s290
    %s292 = sphi 0, %s290
    %s293 = sphi 0, %s292
    %s307 = sphi 0, %s293
    %s311 = sphi 0, %s311
    %s313 = sphi 0, %s311
    %s314 = sphi 0, %s313
    %s328 = sphi 0, %s314
    %s334 = sphi 0, %s336
    %s337 = sphi 0, %s334
    %s338 = sphi 0, %s337
    %s354 = sphi 0, %s338
    %s360 = sphi 0, %s362
    %s363 = sphi 0, %s360
    %s364 = sphi 0, %s363
    %s380 = sphi 0, %s364
    %s386 = sphi 0, %s388
    %s389 = sphi 0, %s386
    %s390 = sphi 0, %s389
    %s406 = sphi 0, %s390
    %s412 = sphi 0, %s414
    %s415 = sphi 0, %s412
    %s416 = sphi 0, %s415
    %s432 = sphi 0, %s416
    %s438 = sphi 0, %s440
    %s441 = sphi 0, %s438
    %s442 = sphi 0, %s441
    %s458 = sphi 0, %s442
    %s464 = sphi 0, %s466
    %s467 = sphi 0, %s464
    %s468 = sphi 0, %s467
    %s484 = sphi 0, %s468
  $region4: #{_lambda_.1} parent=0 // loop_header_branch
    %27 = sbr.rel (%p25) target = $region8
  $region5: #{_lambda_.1} parent=0 // loop_body
    %s29 = ssub.s32 %s24, 1
    %s30 = ssub.s32 %s24, 2
    %s37 = sadd.s32 1, %s32
    %p38 = scmp.ge.s32.totalorder %s37, 2
    %s39 = scalar_select %p38, 0, %s37
    %s40 = sadd.s32 1, %s31
    %s41 = scalar_select %p38, %s40, %s31
    %p42 = scmp.ge.s32.totalorder %s41, 2
    %s43 = scalar_select %p42, 0, %s41
    %s44 = ssub.s32 %s31, %s43
    %p45 = scmp.eq.s32.totalorder %s44, 0
    %s47 = sadd.s32 %s46, 1
    %s48 = scalar_select %p45, %s46, %s47
    %p51 = pneg %p45
    %p52 = scmp.eq.s32.totalorder %s24, 3
    %p53 = por %p51, %p52
    %p54 = scmp.ne.s32.totalorder %s46, %s49
    %p55 = scmp.eq.s32.totalorder %s24, 0
    %p56 = por %p54, %p55
    %p57 = scmp.ne.s32.totalorder %s46, %s49
    %p58 = scmp.eq.s32.totalorder %s29, 3
    %p59 = por %p57, %p58
    %p60 = scmp.ne.s32.totalorder %s49, %s50
    %p61 = scmp.eq.s32.totalorder %s29, 0
    %p62 = por %p60, %p61
    %p63 = scmp.ne.s32.totalorder %s49, %s50
    %p64 = scmp.eq.s32.totalorder %s30, 3
    %p65 = por %p63, %p64
    %p67 = scmp.ne.s32.totalorder %s50, %s66
    %p68 = scmp.eq.s32.totalorder %s30, 0
    %p69 = por %p67, %p68
    %s70 = ssub.s32 %s31, %s43
    %p71 = scmp.eq.s32.totalorder %s70, 0
    %s73 = sadd.s32 %s72, 1
    %s74 = scalar_select %p71, %s72, %s73
    %p77 = pneg %p71
    %p78 = scmp.eq.s32.totalorder %s24, 3
    %p79 = por %p77, %p78
    %p80 = scmp.ne.s32.totalorder %s72, %s75
    %p81 = scmp.eq.s32.totalorder %s24, 0
    %p82 = por %p80, %p81
    %p83 = scmp.ne.s32.totalorder %s72, %s75
    %p84 = scmp.eq.s32.totalorder %s29, 3
    %p85 = por %p83, %p84
    %p86 = scmp.ne.s32.totalorder %s75, %s76
    %p87 = scmp.eq.s32.totalorder %s29, 0
    %p88 = por %p86, %p87
    %p89 = scmp.ne.s32.totalorder %s75, %s76
    %p90 = scmp.eq.s32.totalorder %s30, 3
    %p91 = por %p89, %p90
    %p93 = scmp.ne.s32.totalorder %s76, %s92
    %p94 = scmp.eq.s32.totalorder %s30, 0
    %p95 = por %p93, %p94
    %s96 = ssub.s32 %s31, %s43
    %p97 = scmp.eq.s32.totalorder %s96, 0
    %s99 = sadd.s32 %s98, 1
    %s100 = scalar_select %p97, %s98, %s99
    %p103 = pneg %p97
    %p104 = scmp.eq.s32.totalorder %s24, 3
    %p105 = por %p103, %p104
    %p106 = scmp.ne.s32.totalorder %s98, %s101
    %p107 = scmp.eq.s32.totalorder %s24, 0
    %p108 = por %p106, %p107
    %p109 = scmp.ne.s32.totalorder %s98, %s101
    %p110 = scmp.eq.s32.totalorder %s29, 3
    %p111 = por %p109, %p110
    %p112 = scmp.ne.s32.totalorder %s101, %s102
    %p113 = scmp.eq.s32.totalorder %s29, 0
    %p114 = por %p112, %p113
    %p115 = scmp.ne.s32.totalorder %s101, %s102
    %p116 = scmp.eq.s32.totalorder %s30, 3
    %p117 = por %p115, %p116
    %p119 = scmp.ne.s32.totalorder %s102, %s118
    %p120 = scmp.eq.s32.totalorder %s30, 0
    %p121 = por %p119, %p120
    %s123 = sadd.s32 %s122, 1
    %p126 = scmp.eq.s32.totalorder %s24, 3
    %p127 = scmp.ne.s32.totalorder %s122, %s124
    %p128 = scmp.eq.s32.totalorder %s24, 0
    %p129 = por %p127, %p128
    %p130 = scmp.ne.s32.totalorder %s122, %s124
    %p131 = scmp.eq.s32.totalorder %s29, 3
    %p132 = por %p130, %p131
    %p133 = scmp.ne.s32.totalorder %s124, %s125
    %p134 = scmp.eq.s32.totalorder %s29, 0
    %p135 = por %p133, %p134
    %p136 = scmp.ne.s32.totalorder %s124, %s125
    %p137 = scmp.eq.s32.totalorder %s30, 3
    %p138 = por %p136, %p137
    %p140 = scmp.ne.s32.totalorder %s125, %s139
    %p141 = scmp.eq.s32.totalorder %s30, 0
    %p142 = por %p140, %p141
    %s144 = sadd.s32 %s143, 1
    %p147 = scmp.eq.s32.totalorder %s24, 3
    %p148 = scmp.ne.s32.totalorder %s143, %s145
    %p149 = scmp.eq.s32.totalorder %s24, 0
    %p150 = por %p148, %p149
    %p151 = scmp.ne.s32.totalorder %s143, %s145
    %p152 = scmp.eq.s32.totalorder %s29, 3
    %p153 = por %p151, %p152
    %p154 = scmp.ne.s32.totalorder %s145, %s146
    %p155 = scmp.eq.s32.totalorder %s29, 0
    %p156 = por %p154, %p155
    %p157 = scmp.ne.s32.totalorder %s145, %s146
    %p158 = scmp.eq.s32.totalorder %s30, 3
    %p159 = por %p157, %p158
    %p161 = scmp.ne.s32.totalorder %s146, %s160
    %p162 = scmp.eq.s32.totalorder %s30, 0
    %p163 = por %p161, %p162
    %s165 = sadd.s32 %s164, 1
    %p168 = scmp.eq.s32.totalorder %s24, 3
    %p169 = scmp.ne.s32.totalorder %s164, %s166
    %p170 = scmp.eq.s32.totalorder %s24, 0
    %p171 = por %p169, %p170
    %p172 = scmp.ne.s32.totalorder %s164, %s166
    %p173 = scmp.eq.s32.totalorder %s29, 3
    %p174 = por %p172, %p173
    %p175 = scmp.ne.s32.totalorder %s166, %s167
    %p176 = scmp.eq.s32.totalorder %s29, 0
    %p177 = por %p175, %p176
    %p178 = scmp.ne.s32.totalorder %s166, %s167
    %p179 = scmp.eq.s32.totalorder %s30, 3
    %p180 = por %p178, %p179
    %p182 = scmp.ne.s32.totalorder %s167, %s181
    %p183 = scmp.eq.s32.totalorder %s30, 0
    %p184 = por %p182, %p183
    %s186 = sadd.s32 %s185, 1
    %p189 = scmp.eq.s32.totalorder %s24, 3
    %p190 = scmp.ne.s32.totalorder %s185, %s187
    %p191 = scmp.eq.s32.totalorder %s24, 0
    %p192 = por %p190, %p191
    %p193 = scmp.ne.s32.totalorder %s185, %s187
    %p194 = scmp.eq.s32.totalorder %s29, 3
    %p195 = por %p193, %p194
    %p196 = scmp.ne.s32.totalorder %s187, %s188
    %p197 = scmp.eq.s32.totalorder %s29, 0
    %p198 = por %p196, %p197
    %p199 = scmp.ne.s32.totalorder %s187, %s188
    %p200 = scmp.eq.s32.totalorder %s30, 3
    %p201 = por %p199, %p200
    %p203 = scmp.ne.s32.totalorder %s188, %s202
    %p204 = scmp.eq.s32.totalorder %s30, 0
    %p205 = por %p203, %p204
    %s207 = sadd.s32 %s206, 1
    %p210 = scmp.eq.s32.totalorder %s24, 3
    %p211 = scmp.ne.s32.totalorder %s206, %s208
    %p212 = scmp.eq.s32.totalorder %s24, 0
    %p213 = por %p211, %p212
    %p214 = scmp.ne.s32.totalorder %s206, %s208
    %p215 = scmp.eq.s32.totalorder %s29, 3
    %p216 = por %p214, %p215
    %p217 = scmp.ne.s32.totalorder %s208, %s209
    %p218 = scmp.eq.s32.totalorder %s29, 0
    %p219 = por %p217, %p218
    %p220 = scmp.ne.s32.totalorder %s208, %s209
    %p221 = scmp.eq.s32.totalorder %s30, 3
    %p222 = por %p220, %p221
    %p224 = scmp.ne.s32.totalorder %s209, %s223
    %p225 = scmp.eq.s32.totalorder %s30, 0
    %p226 = por %p224, %p225
    %s228 = sadd.s32 %s227, 1
    %p231 = scmp.eq.s32.totalorder %s24, 3
    %p232 = scmp.ne.s32.totalorder %s227, %s229
    %p233 = scmp.eq.s32.totalorder %s24, 0
    %p234 = por %p232, %p233
    %p235 = scmp.ne.s32.totalorder %s227, %s229
    %p236 = scmp.eq.s32.totalorder %s29, 3
    %p237 = por %p235, %p236
    %p238 = scmp.ne.s32.totalorder %s229, %s230
    %p239 = scmp.eq.s32.totalorder %s29, 0
    %p240 = por %p238, %p239
    %p241 = scmp.ne.s32.totalorder %s229, %s230
    %p242 = scmp.eq.s32.totalorder %s30, 3
    %p243 = por %p241, %p242
    %p245 = scmp.ne.s32.totalorder %s230, %s244
    %p246 = scmp.eq.s32.totalorder %s30, 0
    %p247 = por %p245, %p246
    %s249 = sadd.s32 %s248, 1
    %p252 = scmp.eq.s32.totalorder %s24, 3
    %p253 = scmp.ne.s32.totalorder %s248, %s250
    %p254 = scmp.eq.s32.totalorder %s24, 0
    %p255 = por %p253, %p254
    %p256 = scmp.ne.s32.totalorder %s248, %s250
    %p257 = scmp.eq.s32.totalorder %s29, 3
    %p258 = por %p256, %p257
    %p259 = scmp.ne.s32.totalorder %s250, %s251
    %p260 = scmp.eq.s32.totalorder %s29, 0
    %p261 = por %p259, %p260
    %p262 = scmp.ne.s32.totalorder %s250, %s251
    %p263 = scmp.eq.s32.totalorder %s30, 3
    %p264 = por %p262, %p263
    %p266 = scmp.ne.s32.totalorder %s251, %s265
    %p267 = scmp.eq.s32.totalorder %s30, 0
    %p268 = por %p266, %p267
    %s270 = sadd.s32 %s269, 1
    %p273 = scmp.eq.s32.totalorder %s24, 3
    %p274 = scmp.ne.s32.totalorder %s269, %s271
    %p275 = scmp.eq.s32.totalorder %s24, 0
    %p276 = por %p274, %p275
    %p277 = scmp.ne.s32.totalorder %s269, %s271
    %p278 = scmp.eq.s32.totalorder %s29, 3
    %p279 = por %p277, %p278
    %p280 = scmp.ne.s32.totalorder %s271, %s272
    %p281 = scmp.eq.s32.totalorder %s29, 0
    %p282 = por %p280, %p281
    %p283 = scmp.ne.s32.totalorder %s271, %s272
    %p284 = scmp.eq.s32.totalorder %s30, 3
    %p285 = por %p283, %p284
    %p287 = scmp.ne.s32.totalorder %s272, %s286
    %p288 = scmp.eq.s32.totalorder %s30, 0
    %p289 = por %p287, %p288
    %s291 = sadd.s32 %s290, 1
    %p294 = scmp.eq.s32.totalorder %s24, 3
    %p295 = scmp.ne.s32.totalorder %s290, %s292
    %p296 = scmp.eq.s32.totalorder %s24, 0
    %p297 = por %p295, %p296
    %p298 = scmp.ne.s32.totalorder %s290, %s292
    %p299 = scmp.eq.s32.totalorder %s29, 3
    %p300 = por %p298, %p299
    %p301 = scmp.ne.s32.totalorder %s292, %s293
    %p302 = scmp.eq.s32.totalorder %s29, 0
    %p303 = por %p301, %p302
    %p304 = scmp.ne.s32.totalorder %s292, %s293
    %p305 = scmp.eq.s32.totalorder %s30, 3
    %p306 = por %p304, %p305
    %p308 = scmp.ne.s32.totalorder %s293, %s307
    %p309 = scmp.eq.s32.totalorder %s30, 0
    %p310 = por %p308, %p309
    %s312 = sadd.s32 %s311, 1
    %p315 = scmp.eq.s32.totalorder %s24, 3
    %p316 = scmp.ne.s32.totalorder %s311, %s313
    %p317 = scmp.eq.s32.totalorder %s24, 0
    %p318 = por %p316, %p317
    %p319 = scmp.ne.s32.totalorder %s311, %s313
    %p320 = scmp.eq.s32.totalorder %s29, 3
    %p321 = por %p319, %p320
    %p322 = scmp.ne.s32.totalorder %s313, %s314
    %p323 = scmp.eq.s32.totalorder %s29, 0
    %p324 = por %p322, %p323
    %p325 = scmp.ne.s32.totalorder %s313, %s314
    %p326 = scmp.eq.s32.totalorder %s30, 3
    %p327 = por %p325, %p326
    %p329 = scmp.ne.s32.totalorder %s314, %s328
    %p330 = scmp.eq.s32.totalorder %s30, 0
    %p331 = por %p329, %p330
    %s332 = ssub.s32 %s32, %s39
    %p333 = scmp.eq.s32.totalorder %s332, 0
    %s335 = sadd.s32 %s334, 1
    %s336 = scalar_select %p333, %s334, %s335
    %p339 = pneg %p333
    %p340 = scmp.eq.s32.totalorder %s24, 3
    %p341 = por %p339, %p340
    %p342 = scmp.ne.s32.totalorder %s334, %s337
    %p343 = scmp.eq.s32.totalorder %s24, 0
    %p344 = por %p342, %p343
    %p345 = scmp.ne.s32.totalorder %s334, %s337
    %p346 = scmp.eq.s32.totalorder %s29, 3
    %p347 = por %p345, %p346
    %p348 = scmp.ne.s32.totalorder %s337, %s338
    %p349 = scmp.eq.s32.totalorder %s29, 0
    %p350 = por %p348, %p349
    %p351 = scmp.ne.s32.totalorder %s337, %s338
    %p352 = scmp.eq.s32.totalorder %s30, 3
    %p353 = por %p351, %p352
    %p355 = scmp.ne.s32.totalorder %s338, %s354
    %p356 = scmp.eq.s32.totalorder %s30, 0
    %p357 = por %p355, %p356
    %s358 = ssub.s32 %s32, %s39
    %p359 = scmp.eq.s32.totalorder %s358, 0
    %s361 = sadd.s32 %s360, 1
    %s362 = scalar_select %p359, %s360, %s361
    %p365 = pneg %p359
    %p366 = scmp.eq.s32.totalorder %s24, 3
    %p367 = por %p365, %p366
    %p368 = scmp.ne.s32.totalorder %s360, %s363
    %p369 = scmp.eq.s32.totalorder %s24, 0
    %p370 = por %p368, %p369
    %p371 = scmp.ne.s32.totalorder %s360, %s363
    %p372 = scmp.eq.s32.totalorder %s29, 3
    %p373 = por %p371, %p372
    %p374 = scmp.ne.s32.totalorder %s363, %s364
    %p375 = scmp.eq.s32.totalorder %s29, 0
    %p376 = por %p374, %p375
    %p377 = scmp.ne.s32.totalorder %s363, %s364
    %p378 = scmp.eq.s32.totalorder %s30, 3
    %p379 = por %p377, %p378
    %p381 = scmp.ne.s32.totalorder %s364, %s380
    %p382 = scmp.eq.s32.totalorder %s30, 0
    %p383 = por %p381, %p382
    %s384 = ssub.s32 %s32, %s39
    %p385 = scmp.eq.s32.totalorder %s384, 0
    %s387 = sadd.s32 %s386, 1
    %s388 = scalar_select %p385, %s386, %s387
    %p391 = pneg %p385
    %p392 = scmp.eq.s32.totalorder %s24, 3
    %p393 = por %p391, %p392
    %p394 = scmp.ne.s32.totalorder %s386, %s389
    %p395 = scmp.eq.s32.totalorder %s24, 0
    %p396 = por %p394, %p395
    %p397 = scmp.ne.s32.totalorder %s386, %s389
    %p398 = scmp.eq.s32.totalorder %s29, 3
    %p399 = por %p397, %p398
    %p400 = scmp.ne.s32.totalorder %s389, %s390
    %p401 = scmp.eq.s32.totalorder %s29, 0
    %p402 = por %p400, %p401
    %p403 = scmp.ne.s32.totalorder %s389, %s390
    %p404 = scmp.eq.s32.totalorder %s30, 3
    %p405 = por %p403, %p404
    %p407 = scmp.ne.s32.totalorder %s390, %s406
    %p408 = scmp.eq.s32.totalorder %s30, 0
    %p409 = por %p407, %p408
    %s410 = ssub.s32 %s32, %s39
    %p411 = scmp.eq.s32.totalorder %s410, 0
    %s413 = sadd.s32 %s412, 1
    %s414 = scalar_select %p411, %s412, %s413
    %p417 = pneg %p411
    %p418 = scmp.eq.s32.totalorder %s24, 3
    %p419 = por %p417, %p418
    %p420 = scmp.ne.s32.totalorder %s412, %s415
    %p421 = scmp.eq.s32.totalorder %s24, 0
    %p422 = por %p420, %p421
    %p423 = scmp.ne.s32.totalorder %s412, %s415
    %p424 = scmp.eq.s32.totalorder %s29, 3
    %p425 = por %p423, %p424
    %p426 = scmp.ne.s32.totalorder %s415, %s416
    %p427 = scmp.eq.s32.totalorder %s29, 0
    %p428 = por %p426, %p427
    %p429 = scmp.ne.s32.totalorder %s415, %s416
    %p430 = scmp.eq.s32.totalorder %s30, 3
    %p431 = por %p429, %p430
    %p433 = scmp.ne.s32.totalorder %s416, %s432
    %p434 = scmp.eq.s32.totalorder %s30, 0
    %p435 = por %p433, %p434
    %s436 = ssub.s32 %s32, %s39
    %p437 = scmp.eq.s32.totalorder %s436, 0
    %s439 = sadd.s32 %s438, 1
    %s440 = scalar_select %p437, %s438, %s439
    %p443 = pneg %p437
    %p444 = scmp.eq.s32.totalorder %s24, 3
    %p445 = por %p443, %p444
    %p446 = scmp.ne.s32.totalorder %s438, %s441
    %p447 = scmp.eq.s32.totalorder %s24, 0
    %p448 = por %p446, %p447
    %p449 = scmp.ne.s32.totalorder %s438, %s441
    %p450 = scmp.eq.s32.totalorder %s29, 3
    %p451 = por %p449, %p450
    %p452 = scmp.ne.s32.totalorder %s441, %s442
    %p453 = scmp.eq.s32.totalorder %s29, 0
    %p454 = por %p452, %p453
    %p455 = scmp.ne.s32.totalorder %s441, %s442
    %p456 = scmp.eq.s32.totalorder %s30, 3
    %p457 = por %p455, %p456
    %p459 = scmp.ne.s32.totalorder %s442, %s458
    %p460 = scmp.eq.s32.totalorder %s30, 0
    %p461 = por %p459, %p460
    %s462 = ssub.s32 %s31, %s43
    %p463 = scmp.eq.s32.totalorder %s462, 0
    %s465 = sadd.s32 %s464, 1
    %s466 = scalar_select %p463, %s464, %s465
    %p469 = pneg %p463
    %p470 = scmp.eq.s32.totalorder %s24, 3
    %p471 = por %p469, %p470
    %p472 = scmp.ne.s32.totalorder %s464, %s467
    %p473 = scmp.eq.s32.totalorder %s24, 0
    %p474 = por %p472, %p473
    %p475 = scmp.ne.s32.totalorder %s464, %s467
    %p476 = scmp.eq.s32.totalorder %s29, 3
    %p477 = por %p475, %p476
    %p478 = scmp.ne.s32.totalorder %s467, %s468
    %p479 = scmp.eq.s32.totalorder %s29, 0
    %p480 = por %p478, %p479
    %p481 = scmp.ne.s32.totalorder %s467, %s468
    %p482 = scmp.eq.s32.totalorder %s30, 3
    %p483 = por %p481, %p482
    %p485 = scmp.ne.s32.totalorder %s468, %s484
    %p486 = scmp.eq.s32.totalorder %s30, 0
    %p487 = por %p485, %p486
    %p488 = scmp.le.s32.totalorder 1, %s24
    %p489 = scmp.lt.s32.totalorder %s24, 5
    %p490 = pnand %p488, %p489
    %p491 = pneg %p490
    // Predicated region
    $region9: #{_lambda_.1} parent=5 // pred_check
      _
    $region10: #{_lambda_.1} parent=5 // pred_check_branch
      %493 = sbr.rel (%p490) target = $region12
    $region11: #{_lambda_.1} parent=5 // pred_region
      %s494 = ssub.s32 %s24, 1
      // Predicated region
      $region13: #{_lambda_.1} parent=11 // pred_check
        %p495 = pneg %p135
      $region14: #{_lambda_.1} parent=11 // pred_check_branch
        %497 = sbr.rel (%p495) target = $region16
      $region15: #{_lambda_.1} parent=11 // pred_region
        _
      $region16: #{_lambda_.1} parent=11 // pred_fallthru
        _
      // Predicated region
      $region17: #{_lambda_.1} parent=11 // pred_check
        %p498 = pneg %p156
      $region18: #{_lambda_.1} parent=11 // pred_check_branch
        %500 = sbr.rel (%p498) target = $region20
      $region19: #{_lambda_.1} parent=11 // pred_region
        _
      $region20: #{_lambda_.1} parent=11 // pred_fallthru
        _
      // Predicated region
      $region21: #{_lambda_.1} parent=11 // pred_check
        %p501 = pneg %p177
      $region22: #{_lambda_.1} parent=11 // pred_check_branch
        %503 = sbr.rel (%p501) target = $region24
      $region23: #{_lambda_.1} parent=11 // pred_region
        _
      $region24: #{_lambda_.1} parent=11 // pred_fallthru
        _
      // Predicated region
      $region25: #{_lambda_.1} parent=11 // pred_check
        %p504 = pneg %p198
      $region26: #{_lambda_.1} parent=11 // pred_check_branch
        %506 = sbr.rel (%p504) target = $region28
      $region27: #{_lambda_.1} parent=11 // pred_region
        _
      $region28: #{_lambda_.1} parent=11 // pred_fallthru
        _
      // Predicated region
      $region29: #{_lambda_.1} parent=11 // pred_check
        %p507 = pneg %p219
      $region30: #{_lambda_.1} parent=11 // pred_check_branch
        %509 = sbr.rel (%p507) target = $region32
      $region31: #{_lambda_.1} parent=11 // pred_region
        _
      $region32: #{_lambda_.1} parent=11 // pred_fallthru
        _
      // Predicated region
      $region33: #{_lambda_.1} parent=11 // pred_check
        %p510 = pneg %p240
      $region34: #{_lambda_.1} parent=11 // pred_check_branch
        %512 = sbr.rel (%p510) target = $region36
      $region35: #{_lambda_.1} parent=11 // pred_region
        _
      $region36: #{_lambda_.1} parent=11 // pred_fallthru
        _
      // Predicated region
      $region37: #{_lambda_.1} parent=11 // pred_check
        %p513 = pneg %p261
      $region38: #{_lambda_.1} parent=11 // pred_check_branch
        %515 = sbr.rel (%p513) target = $region40
      $region39: #{_lambda_.1} parent=11 // pred_region
        _
      $region40: #{_lambda_.1} parent=11 // pred_fallthru
        _
      // Predicated region
      $region41: #{_lambda_.1} parent=11 // pred_check
        %p516 = pneg %p282
      $region42: #{_lambda_.1} parent=11 // pred_check_branch
        %518 = sbr.rel (%p516) target = $region44
      $region43: #{_lambda_.1} parent=11 // pred_region
        _
      $region44: #{_lambda_.1} parent=11 // pred_fallthru
        _
      // Predicated region
      $region45: #{_lambda_.1} parent=11 // pred_check
        %p519 = pneg %p303
      $region46: #{_lambda_.1} parent=11 // pred_check_branch
        %521 = sbr.rel (%p519) target = $region48
      $region47: #{_lambda_.1} parent=11 // pred_region
        _
      $region48: #{_lambda_.1} parent=11 // pred_fallthru
        _
      // Predicated region
      $region49: #{_lambda_.1} parent=11 // pred_check
        %p522 = pneg %p324
      $region50: #{_lambda_.1} parent=11 // pred_check_branch
        %524 = sbr.rel (%p522) target = $region52
      $region51: #{_lambda_.1} parent=11 // pred_region
        _
      $region52: #{_lambda_.1} parent=11 // pred_fallthru
        _
    $region12: #{_lambda_.1} parent=5 // pred_fallthru
      _
    %p525 = scmp.lt.s32.totalorder %s24, 4
    // Predicated region
    $region53: #{_lambda_.1} parent=5 // pred_check
      %p526 = pneg %p525
    $region54: #{_lambda_.1} parent=5 // pred_check_branch
      %528 = sbr.rel (%p526) target = $region56
    $region55: #{_lambda_.1} parent=5 // pred_region
      // Predicated region
      $region57: #{_lambda_.1} parent=55 // pred_check
        %p529 = pneg %p56
      $region58: #{_lambda_.1} parent=55 // pred_check_branch
        %531 = sbr.rel (%p529) target = $region60
      $region59: #{_lambda_.1} parent=55 // pred_region
        %s532 = smul.u32 8, %s31
        %p533 = scmp.lt.s32.totalorder %s532, 15
        %s534 = scalar_select %p533, %s532, 15
        %s535 = smul.addr %s534, 4
        %s536 = scalar_lea.vmem %s0, %s535
        %s537 = smul.u32 8, %s31
      $region60: #{_lambda_.1} parent=55 // pred_fallthru
        _
      // Predicated region
      $region61: #{_lambda_.1} parent=55 // pred_check
        %p538 = pneg %p82
      $region62: #{_lambda_.1} parent=55 // pred_check_branch
        %540 = sbr.rel (%p538) target = $region64
      $region63: #{_lambda_.1} parent=55 // pred_region
        %s541 = smul.u32 8, %s31
        %p542 = scmp.lt.s32.totalorder %s541, 15
        %s543 = scalar_select %p542, %s541, 15
        %s544 = smul.addr %s543, 4
        %s545 = scalar_lea.vmem %s1, %s544
        %s546 = smul.u32 8, %s31
      $region64: #{_lambda_.1} parent=55 // pred_fallthru
        _
      // Predicated region
      $region65: #{_lambda_.1} parent=55 // pred_check
        %p547 = pneg %p108
      $region66: #{_lambda_.1} parent=55 // pred_check_branch
        %549 = sbr.rel (%p547) target = $region68
      $region67: #{_lambda_.1} parent=55 // pred_region
        %s550 = smul.u32 8, %s31
        %p551 = scmp.lt.s32.totalorder %s550, 15
        %s552 = scalar_select %p551, %s550, 15
        %s553 = smul.addr %s552, 8
        %s554 = scalar_lea.vmem %s2, %s553
        %s555 = smul.u32 8, %s31
      $region68: #{_lambda_.1} parent=55 // pred_fallthru
        _
      // Predicated region
      $region69: #{_lambda_.1} parent=55 // pred_check
        %p556 = pneg %p344
      $region70: #{_lambda_.1} parent=55 // pred_check_branch
        %558 = sbr.rel (%p556) target = $region72
      $region71: #{_lambda_.1} parent=55 // pred_region
        %p559 = scmp.lt.s32.totalorder %s32, 1
        %s560 = scalar_select %p559, %s32, 1
        %s561 = smul.addr %s560, 4
        %s562 = smul.addr %s561, 4
        %s563 = scalar_lea.vmem %s13, %s562
      $region72: #{_lambda_.1} parent=55 // pred_fallthru
        _
      // Predicated region
      $region73: #{_lambda_.1} parent=55 // pred_check
        %p564 = pneg %p370
      $region74: #{_lambda_.1} parent=55 // pred_check_branch
        %566 = sbr.rel (%p564) target = $region76
      $region75: #{_lambda_.1} parent=55 // pred_region
        %p567 = scmp.lt.s32.totalorder %s32, 1
        %s568 = scalar_select %p567, %s32, 1
        %s569 = smul.addr %s568, 4
        %s570 = smul.addr %s569, 4
        %s571 = scalar_lea.vmem %s14, %s570
      $region76: #{_lambda_.1} parent=55 // pred_fallthru
        _
      // Predicated region
      $region77: #{_lambda_.1} parent=55 // pred_check
        %p572 = pneg %p396
      $region78: #{_lambda_.1} parent=55 // pred_check_branch
        %574 = sbr.rel (%p572) target = $region80
      $region79: #{_lambda_.1} parent=55 // pred_region
        %p575 = scmp.lt.s32.totalorder %s32, 1
        %s576 = scalar_select %p575, %s32, 1
        %s577 = smul.addr %s576, 4
        %s578 = smul.addr %s577, 4
        %s579 = scalar_lea.vmem %s15, %s578
      $region80: #{_lambda_.1} parent=55 // pred_fallthru
        _
      // Predicated region
      $region81: #{_lambda_.1} parent=55 // pred_check
        %p580 = pneg %p422
      $region82: #{_lambda_.1} parent=55 // pred_check_branch
        %582 = sbr.rel (%p580) target = $region84
      $region83: #{_lambda_.1} parent=55 // pred_region
        %p583 = scmp.lt.s32.totalorder %s32, 1
        %s584 = scalar_select %p583, %s32, 1
        %s585 = smul.addr %s584, 4
        %s586 = smul.addr %s585, 4
        %s587 = scalar_lea.vmem %s16, %s586
      $region84: #{_lambda_.1} parent=55 // pred_fallthru
        _
      // Predicated region
      $region85: #{_lambda_.1} parent=55 // pred_check
        %p588 = pneg %p448
      $region86: #{_lambda_.1} parent=55 // pred_check_branch
        %590 = sbr.rel (%p588) target = $region88
      $region87: #{_lambda_.1} parent=55 // pred_region
        %p591 = scmp.lt.s32.totalorder %s32, 1
        %s592 = scalar_select %p591, %s32, 1
        %s593 = smul.addr %s592, 8
        %s594 = scalar_lea.vmem %s17, %s593
      $region88: #{_lambda_.1} parent=55 // pred_fallthru
        _
    $region56: #{_lambda_.1} parent=5 // pred_fallthru
      _
    %p595 = scmp.le.s32.totalorder 1, %s24
    %p596 = scmp.lt.s32.totalorder %s24, 5
    %p597 = pnand %p595, %p596
    %p598 = pneg %p597
    // Predicated region
    $region89: #{_lambda_.1} parent=5 // pred_check
      _
    $region90: #{_lambda_.1} parent=5 // pred_check_branch
      %600 = sbr.rel (%p597) target = $region92
    $region91: #{_lambda_.1} parent=5 // pred_region
      %s601 = ssub.s32 %s24, 1
      %s602 = smul.u32 8, %s33
      %p603 = scmp.lt.s32.totalorder %s602, 15
      %s604 = scalar_select %p603, %s602, 15
      %s605 = smul.addr %s604, 4
      %s606 = scalar_lea.vmem %s0, %s605
      %p607 = pneg %p62
      %p608 = pneg %p59
      %s609 = smul.u32 8, %s33
      %p610 = scmp.lt.s32.totalorder %s609, 15
      %s611 = scalar_select %p610, %s609, 15
      %s612 = smul.addr %s611, 4
      %s613 = scalar_lea.vmem %s1, %s612
      %p614 = pneg %p88
      %p615 = pneg %p85
      %s616 = smul.u32 8, %s33
      %p617 = scmp.lt.s32.totalorder %s616, 15
      %s618 = scalar_select %p617, %s616, 15
      %s619 = smul.addr %s618, 8
      %s620 = scalar_lea.vmem %s2, %s619
      %p621 = pneg %p114
      %p622 = pneg %p111
      %p623 = pneg %p135
      %p624 = pneg %p132
      %p625 = pneg %p156
      %p626 = pneg %p153
      %p627 = pneg %p177
      %p628 = pneg %p174
      %p629 = pneg %p198
      %p630 = pneg %p195
      %p631 = pneg %p219
      %p632 = pneg %p216
      %p633 = pneg %p240
      %p634 = pneg %p237
      %p635 = pneg %p261
      %p636 = pneg %p258
      %p637 = pneg %p282
      %p638 = pneg %p279
      %p639 = pneg %p303
      %p640 = pneg %p300
      %p641 = pneg %p324
      %p642 = pneg %p321
      %p643 = scmp.lt.s32.totalorder %s34, 1
      %s644 = scalar_select %p643, %s34, 1
      %s645 = smul.addr %s644, 4
      %s646 = smul.addr %s645, 4
      %s647 = scalar_lea.vmem %s13, %s646
      %p648 = pneg %p350
      %p649 = pneg %p347
      %p650 = scmp.lt.s32.totalorder %s34, 1
      %s651 = scalar_select %p650, %s34, 1
      %s652 = smul.addr %s651, 4
      %s653 = smul.addr %s652, 4
      %s654 = scalar_lea.vmem %s14, %s653
      %p655 = pneg %p376
      %p656 = pneg %p373
      %p657 = scmp.lt.s32.totalorder %s34, 1
      %s658 = scalar_select %p657, %s34, 1
      %s659 = smul.addr %s658, 4
      %s660 = smul.addr %s659, 4
      %s661 = scalar_lea.vmem %s15, %s660
      %p662 = pneg %p402
      %p663 = pneg %p399
      %p664 = scmp.lt.s32.totalorder %s34, 1
      %s665 = scalar_select %p664, %s34, 1
      %s666 = smul.addr %s665, 4
      %s667 = smul.addr %s666, 4
      %s668 = scalar_lea.vmem %s16, %s667
      %p669 = pneg %p428
      %p670 = pneg %p425
      %p671 = scmp.lt.s32.totalorder %s34, 1
      %s672 = scalar_select %p671, %s34, 1
      %s673 = smul.addr %s672, 8
      %s674 = scalar_lea.vmem %s17, %s673
      %p675 = pneg %p454
      %p676 = pneg %p451
      %p677 = pneg %p480
      %p678 = pneg %p477
      %s679 = smul.u32 8, %s33
      %p680 = scmp.lt.s32.totalorder %s679, 15
      %s681 = scalar_select %p680, %s679, 15
      %s682 = smul.addr %s681, 2
      %s683 = smul.addr %s682, 8
      %s684 = scalar_lea.vmem %s18, %s683
      %s685 = smul.u32 8, %s33
      %p686 = scmp.lt.s32.totalorder %s685, 15
      %s687 = scalar_select %p686, %s685, 15
      %s688 = smul.addr %s687, 4
      %s689 = scalar_lea.vmem %s0, %s688
      %s690 = smul.u32 8, %s33
      %s691 = smul.u32 8, %s33
      %p692 = scmp.lt.s32.totalorder %s691, 15
      %s693 = scalar_select %p692, %s691, 15
      %s694 = smul.addr %s693, 4
      %s695 = scalar_lea.vmem %s1, %s694
      %s696 = smul.u32 8, %s33
      %s697 = smul.u32 8, %s33
      %p698 = scmp.lt.s32.totalorder %s697, 15
      %s699 = scalar_select %p698, %s697, 15
      %s700 = smul.addr %s699, 8
      %s701 = scalar_lea.vmem %s2, %s700
      %s702 = smul.u32 8, %s33
      %p703 = scmp.lt.s32.totalorder %s34, 1
      %s704 = scalar_select %p703, %s34, 1
      %s705 = smul.addr %s704, 4
      %s706 = smul.addr %s705, 4
      %s707 = scalar_lea.vmem %s13, %s706
      %p708 = scmp.lt.s32.totalorder %s34, 1
      %s709 = scalar_select %p708, %s34, 1
      %s710 = smul.addr %s709, 4
      %s711 = smul.addr %s710, 4
      %s712 = scalar_lea.vmem %s14, %s711
      %p713 = scmp.lt.s32.totalorder %s34, 1
      %s714 = scalar_select %p713, %s34, 1
      %s715 = smul.addr %s714, 4
      %s716 = smul.addr %s715, 4
      %s717 = scalar_lea.vmem %s15, %s716
      %p718 = scmp.lt.s32.totalorder %s34, 1
      %s719 = scalar_select %p718, %s34, 1
      %s720 = smul.addr %s719, 4
      %s721 = smul.addr %s720, 4
      %s722 = scalar_lea.vmem %s16, %s721
      %p723 = scmp.lt.s32.totalorder %s34, 1
      %s724 = scalar_select %p723, %s34, 1
      %s725 = smul.addr %s724, 8
      %s726 = scalar_lea.vmem %s17, %s725
      %s727 = smul.u32 8, %s33
      %p728 = scmp.lt.s32.totalorder %s727, 15
      %s729 = scalar_select %p728, %s727, 15
      %s730 = smul.addr %s729, 2
      %s731 = smul.addr %s730, 8
      %s732 = scalar_lea.vmem %s18, %s731
      %s733 = smul.u32 8, %s33
      %p735 = scmp.eq.s32.totalorder %s34, 0
      // Predicated region
      $region93: #{_lambda_.1} parent=91 // pred_check
        %p736 = pneg %p735
      $region94: #{_lambda_.1} parent=91 // pred_check_branch
        %738 = sbr.rel (%p736) target = $region96
      $region95: #{_lambda_.1} parent=91 // pred_region
        %v739 = vld [vmem:[%s689] sm:$0xf]
        %v740 = vld [vmem:[%s689 + $0x4] sm:$0xf]
        %v741 = vld [vmem:[%s689 + $0x8] sm:$0xf]
        %v742 = vld [vmem:[%s689 + $0xc] sm:$0xf]
        %v743 = vld [vmem:[%s689 + $0x10] sm:$0xf]
        %v744 = vld [vmem:[%s689 + $0x14] sm:$0xf]
        %v745 = vld [vmem:[%s689 + $0x18] sm:$0xf]
        %v746 = vld [vmem:[%s689 + $0x1c] sm:$0xf]
        %v747 = vld [vmem:[%s3] sm:$0xf]
        %v748 = vld [vmem:[%s3 + $0x4] sm:$0xf]
        %v749 = vld [vmem:[%s4] sm:$0x1]
        %v751 = vlaneseq
        %v752 = vshrl.u32 %v751, 7
        %v753 = vsub.s32 0, %v752
        %v754 = vrot.slane %v749, %v753
        %v764 = vunpack.c.l.b16 %v739
        %v765 = vunpack.c.l.b16 %v740
        %v766 = vunpack.c.l.b16 %v741
        %v767 = vunpack.c.l.b16 %v742
        %v768 = vunpack.c.l.b16 %v743
        %v769 = vunpack.c.l.b16 %v744
        %v770 = vunpack.c.l.b16 %v745
        %v771 = vunpack.c.l.b16 %v746
        %v772 = vpack.c.b16 %v765, %v764
        %v773 = vpack.c.b16 %v767, %v766
        %v774 = vpack.c.b16 %v769, %v768
        %v775 = vpack.c.b16 %v771, %v770
        %v778 = vunpack.c.l.b16 %v747
        %v779 = vunpack.c.l.b16 %v748
        %v780 = vpack.c.b16 %v779, %v778
        %vm782 = vcmask 130048
        %v784 = vsel %vm782, %v772, 0
        %v787 = vsel %vm782, %v773, 0
        %v790 = vsel %vm782, %v774, 0
        %v793 = vsel %vm782, %v775, 0
        %795 = vmatprep.subr.bf16.mxu0 0
        %796 = vmatpush1.bf16.msra.mxu0 0
        %797 = vmatprep.subr.bf16.mxu0 0
        %798 = vmatpush1.bf16.msra.mxu0 0
        %799 = vmatprep.subr.bf16.mxu0 0
        %800 = vmatpush1.bf16.msra.mxu0 0
        %801 = vmatprep.subr.bf16.mxu0 0
        %802 = vmatpush1.bf16.msra.mxu0 0
        %803 = vmatprep.subr.bf16.mxu0 0
        %804 = vmatpush1.bf16.msra.mxu0 0
        %805 = vmatprep.subr.bf16.mxu0 0
        %806 = vmatpush1.bf16.msra.mxu0 0
        %807 = vmatprep.subr.bf16.mxu0 0
        %808 = vmatpush1.bf16.msra.mxu0 0
        %809 = vmatprep.subr.bf16.mxu0 0
        %810 = vmatpush1.bf16.msra.mxu0 %v780
        %811 = vmatprep.subr.bf16.mxu0 0
        %812 = vmatpush2.bf16.msra.mxu0 0
        %813 = vmatprep.subr.bf16.mxu0 0
        %814 = vmatpush2.bf16.msra.mxu0 0
        %815 = vmatprep.subr.bf16.mxu0 0
        %816 = vmatpush2.bf16.msra.mxu0 0
        %817 = vmatprep.subr.bf16.mxu0 0
        %818 = vmatpush2.bf16.msra.mxu0 0
        %819 = vmatprep.subr.bf16.mxu0 0
        %820 = vmatpush2.bf16.msra.mxu0 0
        %821 = vmatprep.subr.bf16.mxu0 0
        %822 = vmatpush2.bf16.msra.mxu0 0
        %823 = vmatprep.subr.bf16.mxu0 0
        %824 = vmatpush2.bf16.msra.mxu0 0
        %825 = vmatprep.subr.bf16.mxu0 0
        %826 = vmatpush2.bf16.msra.mxu0 0
        %827 = vmatprep.mubr.bf16.mxu0 0
        %828 = vmatmul.mubr.bf16.gmra.mxu0 %v784
        %v829 = vpop.f32.mrf.mxu0
        %v830 = vadd.f32 %v754, %v829
        %v831 = vpop.f32.mrf.mxu0
        %v832 = vpop.f32.mrf.mxu0
        %v833 = vadd.f32 %v754, %v832
        %v834 = vpop.f32.mrf.mxu0
        %835 = vmatprep.mubr.bf16.mxu0 0
        %836 = vmatmul.mubr.bf16.gmra.mxu0 %v787
        %v837 = vpop.f32.mrf.mxu0
        %v838 = vadd.f32 %v754, %v837
        %v839 = vpop.f32.mrf.mxu0
        %v840 = vpop.f32.mrf.mxu0
        %v841 = vadd.f32 %v754, %v840
        %v842 = vpop.f32.mrf.mxu0
        %843 = vmatprep.mubr.bf16.mxu0 0
        %844 = vmatmul.mubr.bf16.gmra.mxu0 %v790
        %v845 = vpop.f32.mrf.mxu0
        %v846 = vadd.f32 %v754, %v845
        %v847 = vpop.f32.mrf.mxu0
        %v848 = vpop.f32.mrf.mxu0
        %v849 = vadd.f32 %v754, %v848
        %v850 = vpop.f32.mrf.mxu0
        %851 = vmatprep.mubr.bf16.mxu0 0
        %852 = vmatmul.mubr.bf16.gmra.mxu0 %v793
        %v853 = vpop.f32.mrf.mxu0
        %v854 = vadd.f32 %v754, %v853
        %v855 = vpop.f32.mrf.mxu0
        %v856 = vpop.f32.mrf.mxu0
        %v857 = vadd.f32 %v754, %v856
        %v858 = vpop.f32.mrf.mxu0
        %859 = vdwg.mxu0
        %vm860 = vcmask 261120
        %861 = vst.msk [vmem:[#allocation2] sm:$0xff] %vm860, %v830
        %862 = vst.msk [vmem:[#allocation2 + $0x8] sm:$0xff] %vm860, %v833
        %863 = vst.msk [vmem:[#allocation2 + $0x10] sm:$0xff] %vm860, %v838
        %864 = vst.msk [vmem:[#allocation2 + $0x18] sm:$0xff] %vm860, %v841
        %865 = vst.msk [vmem:[#allocation2 + $0x20] sm:$0xff] %vm860, %v846
        %866 = vst.msk [vmem:[#allocation2 + $0x28] sm:$0xff] %vm860, %v849
        %867 = vst.msk [vmem:[#allocation2 + $0x30] sm:$0xff] %vm860, %v854
        %868 = vst.msk [vmem:[#allocation2 + $0x38] sm:$0xff] %vm860, %v857
        %v869 = vld [vmem:[%s695] sm:$0xf]
        %v870 = vld [vmem:[%s695 + $0x4] sm:$0xf]
        %v871 = vld [vmem:[%s695 + $0x8] sm:$0xf]
        %v872 = vld [vmem:[%s695 + $0xc] sm:$0xf]
        %v873 = vld [vmem:[%s695 + $0x10] sm:$0xf]
        %v874 = vld [vmem:[%s695 + $0x14] sm:$0xf]
        %v875 = vld [vmem:[%s695 + $0x18] sm:$0xf]
        %v876 = vld [vmem:[%s695 + $0x1c] sm:$0xf]
        %v877 = vld [vmem:[%s5] sm:$0xf]
        %v878 = vld [vmem:[%s5 + $0x4] sm:$0xf]
        %v879 = vld [vmem:[%s6] sm:$0x1]
        %v881 = vlaneseq
        %v882 = vshrl.u32 %v881, 7
        %v883 = vsub.s32 0, %v882
        %v884 = vrot.slane %v879, %v883
        %v894 = vunpack.c.l.b16 %v869
        %v895 = vunpack.c.l.b16 %v870
        %v896 = vunpack.c.l.b16 %v871
        %v897 = vunpack.c.l.b16 %v872
        %v898 = vunpack.c.l.b16 %v873
        %v899 = vunpack.c.l.b16 %v874
        %v900 = vunpack.c.l.b16 %v875
        %v901 = vunpack.c.l.b16 %v876
        %v902 = vpack.c.b16 %v895, %v894
        %v903 = vpack.c.b16 %v897, %v896
        %v904 = vpack.c.b16 %v899, %v898
        %v905 = vpack.c.b16 %v901, %v900
        %v908 = vunpack.c.l.b16 %v877
        %v909 = vunpack.c.l.b16 %v878
        %v910 = vpack.c.b16 %v909, %v908
        %v913 = vsel %vm782, %v902, 0
        %v916 = vsel %vm782, %v903, 0
        %v919 = vsel %vm782, %v904, 0
        %v922 = vsel %vm782, %v905, 0
        %924 = vmatprep.subr.bf16.mxu0 0
        %925 = vmatpush1.bf16.msra.mxu0 0
        %926 = vmatprep.subr.bf16.mxu0 0
        %927 = vmatpush1.bf16.msra.mxu0 0
        %928 = vmatprep.subr.bf16.mxu0 0
        %929 = vmatpush1.bf16.msra.mxu0 0
        %930 = vmatprep.subr.bf16.mxu0 0
        %931 = vmatpush1.bf16.msra.mxu0 0
        %932 = vmatprep.subr.bf16.mxu0 0
        %933 = vmatpush1.bf16.msra.mxu0 0
        %934 = vmatprep.subr.bf16.mxu0 0
        %935 = vmatpush1.bf16.msra.mxu0 0
        %936 = vmatprep.subr.bf16.mxu0 0
        %937 = vmatpush1.bf16.msra.mxu0 0
        %938 = vmatprep.subr.bf16.mxu0 0
        %939 = vmatpush1.bf16.msra.mxu0 %v910
        %940 = vmatprep.subr.bf16.mxu0 0
        %941 = vmatpush2.bf16.msra.mxu0 0
        %942 = vmatprep.subr.bf16.mxu0 0
        %943 = vmatpush2.bf16.msra.mxu0 0
        %944 = vmatprep.subr.bf16.mxu0 0
        %945 = vmatpush2.bf16.msra.mxu0 0
        %946 = vmatprep.subr.bf16.mxu0 0
        %947 = vmatpush2.bf16.msra.mxu0 0
        %948 = vmatprep.subr.bf16.mxu0 0
        %949 = vmatpush2.bf16.msra.mxu0 0
        %950 = vmatprep.subr.bf16.mxu0 0
        %951 = vmatpush2.bf16.msra.mxu0 0
        %952 = vmatprep.subr.bf16.mxu0 0
        %953 = vmatpush2.bf16.msra.mxu0 0
        %954 = vmatprep.subr.bf16.mxu0 0
        %955 = vmatpush2.bf16.msra.mxu0 0
        %956 = vmatprep.mubr.bf16.mxu0 0
        %957 = vmatmul.mubr.bf16.gmra.mxu0 %v913
        %v958 = vpop.f32.mrf.mxu0
        %v959 = vadd.f32 %v884, %v958
        %v960 = vpop.f32.mrf.mxu0
        %v961 = vpop.f32.mrf.mxu0
        %v962 = vadd.f32 %v884, %v961
        %v963 = vpop.f32.mrf.mxu0
        %964 = vmatprep.mubr.bf16.mxu0 0
        %965 = vmatmul.mubr.bf16.gmra.mxu0 %v916
        %v966 = vpop.f32.mrf.mxu0
        %v967 = vadd.f32 %v884, %v966
        %v968 = vpop.f32.mrf.mxu0
        %v969 = vpop.f32.mrf.mxu0
        %v970 = vadd.f32 %v884, %v969
        %v971 = vpop.f32.mrf.mxu0
        %972 = vmatprep.mubr.bf16.mxu0 0
        %973 = vmatmul.mubr.bf16.gmra.mxu0 %v919
        %v974 = vpop.f32.mrf.mxu0
        %v975 = vadd.f32 %v884, %v974
        %v976 = vpop.f32.mrf.mxu0
        %v977 = vpop.f32.mrf.mxu0
        %v978 = vadd.f32 %v884, %v977
        %v979 = vpop.f32.mrf.mxu0
        %980 = vmatprep.mubr.bf16.mxu0 0
        %981 = vmatmul.mubr.bf16.gmra.mxu0 %v922
        %v982 = vpop.f32.mrf.mxu0
        %v983 = vadd.f32 %v884, %v982
        %v984 = vpop.f32.mrf.mxu0
        %v985 = vpop.f32.mrf.mxu0
        %v986 = vadd.f32 %v884, %v985
        %v987 = vpop.f32.mrf.mxu0
        %988 = vdwg.mxu0
        %v989 = vxor.u32 %v959, 2147483648
        %v990 = vxor.u32 %v962, 2147483648
        %v991 = vxor.u32 %v967, 2147483648
        %v992 = vxor.u32 %v970, 2147483648
        %v993 = vxor.u32 %v975, 2147483648
        %v994 = vxor.u32 %v978, 2147483648
        %v995 = vxor.u32 %v983, 2147483648
        %v996 = vxor.u32 %v986, 2147483648
        %v997 = vmul.f32 %v989, 1.442695
        %v998 = vpow.pop %v997
        %v999 = vmul.f32 %v990, 1.442695
        %v1000 = vpow.pop %v999
        %v1001 = vmul.f32 %v991, 1.442695
        %v1002 = vpow.pop %v1001
        %v1003 = vmul.f32 %v992, 1.442695
        %v1004 = vpow.pop %v1003
        %v1005 = vmul.f32 %v993, 1.442695
        %v1006 = vpow.pop %v1005
        %v1007 = vmul.f32 %v994, 1.442695
        %v1008 = vpow.pop %v1007
        %v1009 = vmul.f32 %v995, 1.442695
        %v1010 = vpow.pop %v1009
        %v1011 = vmul.f32 %v996, 1.442695
        %v1012 = vpow.pop %v1011
        %v1013 = vadd.f32 %v998, 1.0
        %v1014 = vadd.f32 %v1000, 1.0
        %v1015 = vadd.f32 %v1002, 1.0
        %v1016 = vadd.f32 %v1004, 1.0
        %v1017 = vadd.f32 %v1006, 1.0
        %v1018 = vadd.f32 %v1008, 1.0
        %v1019 = vadd.f32 %v1010, 1.0
        %v1020 = vadd.f32 %v1012, 1.0
        %v1021 = vrcp.pop %v1013
        %v1022 = vmul.f32 1.0, %v1021
        %v1023 = vrcp.pop %v1014
        %v1024 = vmul.f32 1.0, %v1023
        %v1025 = vrcp.pop %v1015
        %v1026 = vmul.f32 1.0, %v1025
        %v1027 = vrcp.pop %v1016
        %v1028 = vmul.f32 1.0, %v1027
        %v1029 = vrcp.pop %v1017
        %v1030 = vmul.f32 1.0, %v1029
        %v1031 = vrcp.pop %v1018
        %v1032 = vmul.f32 1.0, %v1031
        %v1033 = vrcp.pop %v1019
        %v1034 = vmul.f32 1.0, %v1033
        %v1035 = vrcp.pop %v1020
        %v1036 = vmul.f32 1.0, %v1035
        %v1037 = vmul.f32 %v959, %v1022
        %v1038 = vmul.f32 %v962, %v1024
        %v1039 = vmul.f32 %v967, %v1026
        %v1040 = vmul.f32 %v970, %v1028
        %v1041 = vmul.f32 %v975, %v1030
        %v1042 = vmul.f32 %v978, %v1032
        %v1043 = vmul.f32 %v983, %v1034
        %v1044 = vmul.f32 %v986, %v1036
        %v1045 = vpack.c.bf16 %v1038, %v1037
        %v1046 = vpack.c.bf16 %v1040, %v1039
        %v1047 = vpack.c.bf16 %v1042, %v1041
        %v1048 = vpack.c.bf16 %v1044, %v1043
        %v1049 = vld [vmem:[%s7] sm:$0xf]
        %v1050 = vld [vmem:[%s7 + $0x4] sm:$0xf]
        %v1051 = vld [vmem:[%s7 + $0x8] sm:$0xf]
        %v1052 = vld [vmem:[%s7 + $0xc] sm:$0xf]
        %v1053 = vld [vmem:[%s8] sm:$0x1]
        %v1055 = vlaneseq
        %v1056 = vshrl.u32 %v1055, 7
        %v1057 = vsub.s32 0, %v1056
        %v1058 = vrot.slane %v1053, %v1057
        %v1064 = vunpack.c.l.b16 %v1049
        %v1065 = vunpack.c.l.b16 %v1050
        %v1066 = vunpack.c.l.b16 %v1051
        %v1067 = vunpack.c.l.b16 %v1052
        %v1068 = vpack.c.b16 %v1065, %v1064
        %v1069 = vpack.c.b16 %v1067, %v1066
        %v1073 = vsel %vm860, %v1045, 0
        %v1076 = vsel %vm860, %v1046, 0
        %v1079 = vsel %vm860, %v1047, 0
        %v1082 = vsel %vm860, %v1048, 0
        %1084 = vmatprep.subr.bf16.mxu0 0
        %1085 = vmatpush1.bf16.msra.mxu0 0
        %1086 = vmatprep.subr.bf16.mxu0 0
        %1087 = vmatpush1.bf16.msra.mxu0 0
        %1088 = vmatprep.subr.bf16.mxu0 0
        %1089 = vmatpush1.bf16.msra.mxu0 0
        %1090 = vmatprep.subr.bf16.mxu0 0
        %1091 = vmatpush1.bf16.msra.mxu0 0
        %1092 = vmatprep.subr.bf16.mxu0 0
        %1093 = vmatpush1.bf16.msra.mxu0 0
        %1094 = vmatprep.subr.bf16.mxu0 0
        %1095 = vmatpush1.bf16.msra.mxu0 0
        %1096 = vmatprep.subr.bf16.mxu0 0
        %1097 = vmatpush1.bf16.msra.mxu0 %v1069
        %1098 = vmatprep.subr.bf16.mxu0 0
        %1099 = vmatpush1.bf16.msra.mxu0 %v1068
        %1100 = vmatprep.subr.bf16.mxu0 0
        %1101 = vmatpush2.bf16.msra.mxu0 0
        %1102 = vmatprep.subr.bf16.mxu0 0
        %1103 = vmatpush2.bf16.msra.mxu0 0
        %1104 = vmatprep.subr.bf16.mxu0 0
        %1105 = vmatpush2.bf16.msra.mxu0 0
        %1106 = vmatprep.subr.bf16.mxu0 0
        %1107 = vmatpush2.bf16.msra.mxu0 0
        %1108 = vmatprep.subr.bf16.mxu0 0
        %1109 = vmatpush2.bf16.msra.mxu0 0
        %1110 = vmatprep.subr.bf16.mxu0 0
        %1111 = vmatpush2.bf16.msra.mxu0 0
        %1112 = vmatprep.subr.bf16.mxu0 0
        %1113 = vmatpush2.bf16.msra.mxu0 0
        %1114 = vmatprep.subr.bf16.mxu0 0
        %1115 = vmatpush2.bf16.msra.mxu0 0
        %1116 = vmatprep.mubr.bf16.mxu0 0
        %1117 = vmatmul.mubr.bf16.gmra.mxu0 %v1073
        %v1118 = vpop.f32.mrf.mxu0
        %v1119 = vadd.f32 %v1058, %v1118
        %v1120 = vpop.f32.mrf.mxu0
        %v1121 = vpop.f32.mrf.mxu0
        %v1122 = vadd.f32 %v1058, %v1121
        %v1123 = vpop.f32.mrf.mxu0
        %1124 = vmatprep.mubr.bf16.mxu0 0
        %1125 = vmatmul.mubr.bf16.gmra.mxu0 %v1076
        %v1126 = vpop.f32.mrf.mxu0
        %v1127 = vadd.f32 %v1058, %v1126
        %v1128 = vpop.f32.mrf.mxu0
        %v1129 = vpop.f32.mrf.mxu0
        %v1130 = vadd.f32 %v1058, %v1129
        %v1131 = vpop.f32.mrf.mxu0
        %1132 = vmatprep.mubr.bf16.mxu0 0
        %1133 = vmatmul.mubr.bf16.gmra.mxu0 %v1079
        %v1134 = vpop.f32.mrf.mxu0
        %v1135 = vadd.f32 %v1058, %v1134
        %v1136 = vpop.f32.mrf.mxu0
        %v1137 = vpop.f32.mrf.mxu0
        %v1138 = vadd.f32 %v1058, %v1137
        %v1139 = vpop.f32.mrf.mxu0
        %1140 = vmatprep.mubr.bf16.mxu0 0
        %1141 = vmatmul.mubr.bf16.gmra.mxu0 %v1082
        %v1142 = vpop.f32.mrf.mxu0
        %v1143 = vadd.f32 %v1058, %v1142
        %v1144 = vpop.f32.mrf.mxu0
        %v1145 = vpop.f32.mrf.mxu0
        %v1146 = vadd.f32 %v1058, %v1145
        %v1147 = vpop.f32.mrf.mxu0
        %1148 = vdwg.mxu0
        %v1149 = vld [vmem:[%s701] sm:$0xff]
        %v1150 = vld [vmem:[%s701 + $0x8] sm:$0xff]
        %v1151 = vld [vmem:[%s701 + $0x10] sm:$0xff]
        %v1152 = vld [vmem:[%s701 + $0x18] sm:$0xff]
        %v1153 = vld [vmem:[%s701 + $0x20] sm:$0xff]
        %v1154 = vld [vmem:[%s701 + $0x28] sm:$0xff]
        %v1155 = vld [vmem:[%s701 + $0x30] sm:$0xff]
        %v1156 = vld [vmem:[%s701 + $0x38] sm:$0xff]
        %v1157 = vadd.f32 %v1119, %v1149
        %v1158 = vadd.f32 %v1122, %v1150
        %v1159 = vadd.f32 %v1127, %v1151
        %v1160 = vadd.f32 %v1130, %v1152
        %v1161 = vadd.f32 %v1135, %v1153
        %v1162 = vadd.f32 %v1138, %v1154
        %v1163 = vadd.f32 %v1143, %v1155
        %v1164 = vadd.f32 %v1146, %v1156
        %v1165 = vxor.u32 %v1157, 2147483648
        %v1166 = vxor.u32 %v1158, 2147483648
        %v1167 = vxor.u32 %v1159, 2147483648
        %v1168 = vxor.u32 %v1160, 2147483648
        %v1169 = vxor.u32 %v1161, 2147483648
        %v1170 = vxor.u32 %v1162, 2147483648
        %v1171 = vxor.u32 %v1163, 2147483648
        %v1172 = vxor.u32 %v1164, 2147483648
        %v1173 = vmul.f32 %v1165, 1.442695
        %v1174 = vpow.pop %v1173
        %v1175 = vmul.f32 %v1166, 1.442695
        %v1176 = vpow.pop %v1175
        %v1177 = vmul.f32 %v1167, 1.442695
        %v1178 = vpow.pop %v1177
        %v1179 = vmul.f32 %v1168, 1.442695
        %v1180 = vpow.pop %v1179
        %v1181 = vmul.f32 %v1169, 1.442695
        %v1182 = vpow.pop %v1181
        %v1183 = vmul.f32 %v1170, 1.442695
        %v1184 = vpow.pop %v1183
        %v1185 = vmul.f32 %v1171, 1.442695
        %v1186 = vpow.pop %v1185
        %v1187 = vmul.f32 %v1172, 1.442695
        %v1188 = vpow.pop %v1187
        %v1189 = vadd.f32 %v1174, 1.0
        %v1190 = vadd.f32 %v1176, 1.0
        %v1191 = vadd.f32 %v1178, 1.0
        %v1192 = vadd.f32 %v1180, 1.0
        %v1193 = vadd.f32 %v1182, 1.0
        %v1194 = vadd.f32 %v1184, 1.0
        %v1195 = vadd.f32 %v1186, 1.0
        %v1196 = vadd.f32 %v1188, 1.0
        %v1197 = vrcp.pop %v1189
        %v1198 = vmul.f32 1.0, %v1197
        %v1199 = vrcp.pop %v1190
        %v1200 = vmul.f32 1.0, %v1199
        %v1201 = vrcp.pop %v1191
        %v1202 = vmul.f32 1.0, %v1201
        %v1203 = vrcp.pop %v1192
        %v1204 = vmul.f32 1.0, %v1203
        %v1205 = vrcp.pop %v1193
        %v1206 = vmul.f32 1.0, %v1205
        %v1207 = vrcp.pop %v1194
        %v1208 = vmul.f32 1.0, %v1207
        %v1209 = vrcp.pop %v1195
        %v1210 = vmul.f32 1.0, %v1209
        %v1211 = vrcp.pop %v1196
        %v1212 = vmul.f32 1.0, %v1211
        %v1213 = vmul.f32 %v1157, %v1198
        %v1214 = vmul.f32 %v1158, %v1200
        %v1215 = vmul.f32 %v1159, %v1202
        %v1216 = vmul.f32 %v1160, %v1204
        %v1217 = vmul.f32 %v1161, %v1206
        %v1218 = vmul.f32 %v1162, %v1208
        %v1219 = vmul.f32 %v1163, %v1210
        %v1220 = vmul.f32 %v1164, %v1212
        %v1221 = vpack.c.bf16 %v1214, %v1213
        %v1222 = vpack.c.bf16 %v1216, %v1215
        %v1223 = vpack.c.bf16 %v1218, %v1217
        %v1224 = vpack.c.bf16 %v1220, %v1219
        %v1229 = vunpack.c.l.b16 %v1221
        %v1230 = vunpack.c.h.b16 %v1221
        %v1231 = vunpack.c.l.b16 %v1222
        %v1232 = vunpack.c.h.b16 %v1222
        %v1233 = vunpack.c.l.b16 %v1223
        %v1234 = vunpack.c.h.b16 %v1223
        %v1235 = vunpack.c.l.b16 %v1224
        %v1236 = vunpack.c.h.b16 %v1224
        %v1237 = vpack.c.b16 %v1229, %v1229
        %v1238 = vpack.c.b16 %v1230, %v1230
        %v1239 = vpack.c.b16 %v1231, %v1231
        %v1240 = vpack.c.b16 %v1232, %v1232
        %v1241 = vpack.c.b16 %v1233, %v1233
        %v1242 = vpack.c.b16 %v1234, %v1234
        %v1243 = vpack.c.b16 %v1235, %v1235
        %v1244 = vpack.c.b16 %v1236, %v1236
        %vm1253 = vcmask 257024
        %1254 = vst.msk [vmem:[#allocation3] sm:$0xf] %vm1253, %v1237
        %1255 = vst.msk [vmem:[#allocation3 + $0x4] sm:$0xf] %vm1253, %v1238
        %1256 = vst.msk [vmem:[#allocation3 + $0x8] sm:$0xf] %vm1253, %v1239
        %1257 = vst.msk [vmem:[#allocation3 + $0xc] sm:$0xf] %vm1253, %v1240
        %1258 = vst.msk [vmem:[#allocation3 + $0x10] sm:$0xf] %vm1253, %v1241
        %1259 = vst.msk [vmem:[#allocation3 + $0x14] sm:$0xf] %vm1253, %v1242
        %1260 = vst.msk [vmem:[#allocation3 + $0x18] sm:$0xf] %vm1253, %v1243
        %1261 = vst.msk [vmem:[#allocation3 + $0x1c] sm:$0xf] %vm1253, %v1244
      $region96: #{_lambda_.1} parent=91 // pred_fallthru
        _
      %v1262 = vld [vmem:[#allocation3] sm:$0xf]
      %v1263 = vld [vmem:[#allocation3 + $0x4] sm:$0xf]
      %v1264 = vld [vmem:[#allocation3 + $0x8] sm:$0xf]
      %v1265 = vld [vmem:[#allocation3 + $0xc] sm:$0xf]
      %v1266 = vld [vmem:[#allocation3 + $0x10] sm:$0xf]
      %v1267 = vld [vmem:[#allocation3 + $0x14] sm:$0xf]
      %v1268 = vld [vmem:[#allocation3 + $0x18] sm:$0xf]
      %v1269 = vld [vmem:[#allocation3 + $0x1c] sm:$0xf]
      %v1270 = vld [vmem:[#allocation2] sm:$0xff]
      %v1271 = vld [vmem:[#allocation2 + $0x8] sm:$0xff]
      %v1272 = vld [vmem:[#allocation2 + $0x10] sm:$0xff]
      %v1273 = vld [vmem:[#allocation2 + $0x18] sm:$0xff]
      %v1274 = vld [vmem:[#allocation2 + $0x20] sm:$0xff]
      %v1275 = vld [vmem:[#allocation2 + $0x28] sm:$0xff]
      %v1276 = vld [vmem:[#allocation2 + $0x30] sm:$0xff]
      %v1277 = vld [vmem:[#allocation2 + $0x38] sm:$0xff]
      %v1278 = vld [vmem:[%s726] sm:$0xff]
      %v1279 = vld [vmem:[%s707] sm:$0xf]
      %v1280 = vld [vmem:[%s707 + $0x4] sm:$0xf]
      %v1281 = vld [vmem:[%s707 + $0x8] sm:$0xf]
      %v1282 = vld [vmem:[%s707 + $0xc] sm:$0xf]
      %v1291 = vunpack.c.l.b16 %v1262
      %v1292 = vunpack.c.l.b16 %v1263
      %v1293 = vunpack.c.l.b16 %v1264
      %v1294 = vunpack.c.l.b16 %v1265
      %v1295 = vunpack.c.l.b16 %v1266
      %v1296 = vunpack.c.l.b16 %v1267
      %v1297 = vunpack.c.l.b16 %v1268
      %v1298 = vunpack.c.l.b16 %v1269
      %v1299 = vpack.c.b16 %v1292, %v1291
      %v1300 = vpack.c.b16 %v1294, %v1293
      %v1301 = vpack.c.b16 %v1296, %v1295
      %v1302 = vpack.c.b16 %v1298, %v1297
      %v1307 = vunpack.c.l.b16 %v1279
      %v1308 = vunpack.c.l.b16 %v1280
      %v1309 = vunpack.c.l.b16 %v1281
      %v1310 = vunpack.c.l.b16 %v1282
      %v1311 = vpack.c.b16 %v1308, %v1307
      %v1312 = vpack.c.b16 %v1310, %v1309
      %vm1315 = vcmask 261120
      %v1317 = vsel %vm1315, %v1299, 0
      %v1320 = vsel %vm1315, %v1300, 0
      %v1323 = vsel %vm1315, %v1301, 0
      %v1326 = vsel %vm1315, %v1302, 0
      %1328 = vmatprep.subr.bf16.mxu0 0
      %1329 = vmatpush1.bf16.msra.mxu0 0
      %1330 = vmatprep.subr.bf16.mxu0 0
      %1331 = vmatpush1.bf16.msra.mxu0 0
      %1332 = vmatprep.subr.bf16.mxu0 0
      %1333 = vmatpush1.bf16.msra.mxu0 0
      %1334 = vmatprep.subr.bf16.mxu0 0
      %1335 = vmatpush1.bf16.msra.mxu0 0
      %1336 = vmatprep.subr.bf16.mxu0 0
      %1337 = vmatpush1.bf16.msra.mxu0 0
      %1338 = vmatprep.subr.bf16.mxu0 0
      %1339 = vmatpush1.bf16.msra.mxu0 0
      %1340 = vmatprep.subr.bf16.mxu0 0
      %1341 = vmatpush1.bf16.msra.mxu0 %v1312
      %1342 = vmatprep.subr.bf16.mxu0 0
      %1343 = vmatpush1.bf16.msra.mxu0 %v1311
      %1344 = vmatprep.subr.bf16.mxu0 0
      %1345 = vmatpush2.bf16.msra.mxu0 0
      %1346 = vmatprep.subr.bf16.mxu0 0
      %1347 = vmatpush2.bf16.msra.mxu0 0
      %1348 = vmatprep.subr.bf16.mxu0 0
      %1349 = vmatpush2.bf16.msra.mxu0 0
      %1350 = vmatprep.subr.bf16.mxu0 0
      %1351 = vmatpush2.bf16.msra.mxu0 0
      %1352 = vmatprep.subr.bf16.mxu0 0
      %1353 = vmatpush2.bf16.msra.mxu0 0
      %1354 = vmatprep.subr.bf16.mxu0 0
      %1355 = vmatpush2.bf16.msra.mxu0 0
      %1356 = vmatprep.subr.bf16.mxu0 0
      %1357 = vmatpush2.bf16.msra.mxu0 0
      %1358 = vmatprep.subr.bf16.mxu0 0
      %1359 = vmatpush2.bf16.msra.mxu0 0
      %1360 = vmatprep.mubr.bf16.mxu0 0
      %1361 = vmatmul.mubr.bf16.gmra.mxu0 %v1317
      %v1362 = vpop.f32.mrf.mxu0
      %v1363 = vadd.f32 0.0, %v1362
      %v1364 = vpop.f32.mrf.mxu0
      %v1365 = vpop.f32.mrf.mxu0
      %v1366 = vadd.f32 0.0, %v1365
      %v1367 = vpop.f32.mrf.mxu0
      %1368 = vmatprep.mubr.bf16.mxu0 0
      %1369 = vmatmul.mubr.bf16.gmra.mxu0 %v1320
      %v1370 = vpop.f32.mrf.mxu0
      %v1371 = vadd.f32 0.0, %v1370
      %v1372 = vpop.f32.mrf.mxu0
      %v1373 = vpop.f32.mrf.mxu0
      %v1374 = vadd.f32 0.0, %v1373
      %v1375 = vpop.f32.mrf.mxu0
      %1376 = vmatprep.mubr.bf16.mxu0 0
      %1377 = vmatmul.mubr.bf16.gmra.mxu0 %v1323
      %v1378 = vpop.f32.mrf.mxu0
      %v1379 = vadd.f32 0.0, %v1378
      %v1380 = vpop.f32.mrf.mxu0
      %v1381 = vpop.f32.mrf.mxu0
      %v1382 = vadd.f32 0.0, %v1381
      %v1383 = vpop.f32.mrf.mxu0
      %1384 = vmatprep.mubr.bf16.mxu0 0
      %1385 = vmatmul.mubr.bf16.gmra.mxu0 %v1326
      %v1386 = vpop.f32.mrf.mxu0
      %v1387 = vadd.f32 0.0, %v1386
      %v1388 = vpop.f32.mrf.mxu0
      %v1389 = vpop.f32.mrf.mxu0
      %v1390 = vadd.f32 0.0, %v1389
      %v1391 = vpop.f32.mrf.mxu0
      %1392 = vdwg.mxu0
      %v1393 = vlaneseq
      %v1394 = vshrl.u32 %v1393, 7
      %v1395 = vsub.s32 0, %v1394
      %v1396 = vrot.slane %v1278, %v1395
      %v1397 = vadd.f32 %v1363, %v1396
      %v1398 = vadd.f32 %v1366, %v1396
      %v1399 = vadd.f32 %v1371, %v1396
      %v1400 = vadd.f32 %v1374, %v1396
      %v1401 = vadd.f32 %v1379, %v1396
      %v1402 = vadd.f32 %v1382, %v1396
      %v1403 = vadd.f32 %v1387, %v1396
      %v1404 = vadd.f32 %v1390, %v1396
      %v1405 = vlaneseq
      %v1406 = vshrl.u32 %v1405, 7
      %v1407 = vsub.s32 1, %v1406
      %v1408 = vrot.slane %v1278, %v1407
      %1410 = vrot.lane.b32.xlu0 %v1408, 32
      %v1411 = vpop.permute.xlu0 %1410
      %v1413 = vadd.f32 %v1363, %v1411
      %v1414 = vadd.f32 %v1366, %v1411
      %v1415 = vadd.f32 %v1371, %v1411
      %v1416 = vadd.f32 %v1374, %v1411
      %v1417 = vadd.f32 %v1379, %v1411
      %v1418 = vadd.f32 %v1382, %v1411
      %v1419 = vadd.f32 %v1387, %v1411
      %v1420 = vadd.f32 %v1390, %v1411
      %v1421 = vsel %vm1315, %v1270, 0.0
      %1422 = vadd.xlane.f32.xlu0 %v1421
      %v1423 = vpop.xlane.xlu0 %1422
      %v1424 = vsel %vm1315, %v1271, 0.0
      %1425 = vadd.xlane.f32.xlu0 %v1424
      %v1426 = vpop.xlane.xlu0 %1425
      %v1427 = vsel %vm1315, %v1272, 0.0
      %1428 = vadd.xlane.f32.xlu0 %v1427
      %v1429 = vpop.xlane.xlu0 %1428
      %v1430 = vsel %vm1315, %v1273, 0.0
      %1431 = vadd.xlane.f32.xlu0 %v1430
      %v1432 = vpop.xlane.xlu0 %1431
      %v1433 = vsel %vm1315, %v1274, 0.0
      %1434 = vadd.xlane.f32.xlu0 %v1433
      %v1435 = vpop.xlane.xlu0 %1434
      %v1436 = vsel %vm1315, %v1275, 0.0
      %1437 = vadd.xlane.f32.xlu0 %v1436
      %v1438 = vpop.xlane.xlu0 %1437
      %v1439 = vsel %vm1315, %v1276, 0.0
      %1440 = vadd.xlane.f32.xlu0 %v1439
      %v1441 = vpop.xlane.xlu0 %1440
      %v1442 = vsel %vm1315, %v1277, 0.0
      %1443 = vadd.xlane.f32.xlu0 %v1442
      %v1444 = vpop.xlane.xlu0 %1443
      %v1445 = vrcp.pop 32.0
      %v1446 = vmul.f32 %v1423, %v1445
      %v1447 = vmul.f32 %v1426, %v1445
      %v1448 = vmul.f32 %v1429, %v1445
      %v1449 = vmul.f32 %v1432, %v1445
      %v1450 = vmul.f32 %v1435, %v1445
      %v1451 = vmul.f32 %v1438, %v1445
      %v1452 = vmul.f32 %v1441, %v1445
      %v1453 = vmul.f32 %v1444, %v1445
      %v1454 = vsub.f32 %v1270, %v1446
      %v1455 = vsub.f32 %v1271, %v1447
      %v1456 = vsub.f32 %v1272, %v1448
      %v1457 = vsub.f32 %v1273, %v1449
      %v1458 = vsub.f32 %v1274, %v1450
      %v1459 = vsub.f32 %v1275, %v1451
      %v1460 = vsub.f32 %v1276, %v1452
      %v1461 = vsub.f32 %v1277, %v1453
      %v1462 = vmul.f32 %v1454, %v1454
      %v1463 = vmul.f32 %v1455, %v1455
      %v1464 = vmul.f32 %v1456, %v1456
      %v1465 = vmul.f32 %v1457, %v1457
      %v1466 = vmul.f32 %v1458, %v1458
      %v1467 = vmul.f32 %v1459, %v1459
      %v1468 = vmul.f32 %v1460, %v1460
      %v1469 = vmul.f32 %v1461, %v1461
      %v1470 = vsel %vm1315, %v1462, 0.0
      %1471 = vadd.xlane.f32.xlu0 %v1470
      %v1472 = vpop.xlane.xlu0 %1471
      %v1473 = vsel %vm1315, %v1463, 0.0
      %1474 = vadd.xlane.f32.xlu0 %v1473
      %v1475 = vpop.xlane.xlu0 %1474
      %v1476 = vsel %vm1315, %v1464, 0.0
      %1477 = vadd.xlane.f32.xlu0 %v1476
      %v1478 = vpop.xlane.xlu0 %1477
      %v1479 = vsel %vm1315, %v1465, 0.0
      %1480 = vadd.xlane.f32.xlu0 %v1479
      %v1481 = vpop.xlane.xlu0 %1480
      %v1482 = vsel %vm1315, %v1466, 0.0
      %1483 = vadd.xlane.f32.xlu0 %v1482
      %v1484 = vpop.xlane.xlu0 %1483
      %v1485 = vsel %vm1315, %v1467, 0.0
      %1486 = vadd.xlane.f32.xlu0 %v1485
      %v1487 = vpop.xlane.xlu0 %1486
      %v1488 = vsel %vm1315, %v1468, 0.0
      %1489 = vadd.xlane.f32.xlu0 %v1488
      %v1490 = vpop.xlane.xlu0 %1489
      %v1491 = vsel %vm1315, %v1469, 0.0
      %1492 = vadd.xlane.f32.xlu0 %v1491
      %v1493 = vpop.xlane.xlu0 %1492
      %v1494 = vmul.f32 %v1472, %v1445
      %v1495 = vmul.f32 %v1475, %v1445
      %v1496 = vmul.f32 %v1478, %v1445
      %v1497 = vmul.f32 %v1481, %v1445
      %v1498 = vmul.f32 %v1484, %v1445
      %v1499 = vmul.f32 %v1487, %v1445
      %v1500 = vmul.f32 %v1490, %v1445
      %v1501 = vmul.f32 %v1493, %v1445
      %v1502 = vadd.f32 %v1494, 1e-06
      %v1503 = vadd.f32 %v1495, 1e-06
      %v1504 = vadd.f32 %v1496, 1e-06
      %v1505 = vadd.f32 %v1497, 1e-06
      %v1506 = vadd.f32 %v1498, 1e-06
      %v1507 = vadd.f32 %v1499, 1e-06
      %v1508 = vadd.f32 %v1500, 1e-06
      %v1509 = vadd.f32 %v1501, 1e-06
      %v1510 = vrsqrt.pop %v1502
      %v1511 = vrsqrt.pop %v1503
      %v1512 = vrsqrt.pop %v1504
      %v1513 = vrsqrt.pop %v1505
      %v1514 = vrsqrt.pop %v1506
      %v1515 = vrsqrt.pop %v1507
      %v1516 = vrsqrt.pop %v1508
      %v1517 = vrsqrt.pop %v1509
      %v1518 = vmul.f32 %v1454, %v1510
      %v1519 = vmul.f32 %v1455, %v1511
      %v1520 = vmul.f32 %v1456, %v1512
      %v1521 = vmul.f32 %v1457, %v1513
      %v1522 = vmul.f32 %v1458, %v1514
      %v1523 = vmul.f32 %v1459, %v1515
      %v1524 = vmul.f32 %v1460, %v1516
      %v1525 = vmul.f32 %v1461, %v1517
      %v1526 = vadd.f32 %v1413, 1.0
      %v1527 = vadd.f32 %v1414, 1.0
      %v1528 = vadd.f32 %v1415, 1.0
      %v1529 = vadd.f32 %v1416, 1.0
      %v1530 = vadd.f32 %v1417, 1.0
      %v1531 = vadd.f32 %v1418, 1.0
      %v1532 = vadd.f32 %v1419, 1.0
      %v1533 = vadd.f32 %v1420, 1.0
      %1542 = vrot.lane.b32.xlu0 %v1526, 96
      %v1543 = vpop.permute.xlu0 %1542
      %1544 = vrot.lane.b32.xlu0 %v1527, 96
      %v1545 = vpop.permute.xlu0 %1544
      %1546 = vrot.lane.b32.xlu0 %v1528, 96
      %v1547 = vpop.permute.xlu0 %1546
      %1548 = vrot.lane.b32.xlu0 %v1529, 96
      %v1549 = vpop.permute.xlu0 %1548
      %1550 = vrot.lane.b32.xlu0 %v1530, 96
      %v1551 = vpop.permute.xlu0 %1550
      %1552 = vrot.lane.b32.xlu0 %v1531, 96
      %v1553 = vpop.permute.xlu0 %1552
      %1554 = vrot.lane.b32.xlu0 %v1532, 96
      %v1555 = vpop.permute.xlu0 %1554
      %1556 = vrot.lane.b32.xlu0 %v1533, 96
      %v1557 = vpop.permute.xlu0 %1556
      %v1566 = vmul.f32 %v1518, %v1543
      %v1567 = vmul.f32 %v1519, %v1545
      %v1568 = vmul.f32 %v1520, %v1547
      %v1569 = vmul.f32 %v1521, %v1549
      %v1570 = vmul.f32 %v1522, %v1551
      %v1571 = vmul.f32 %v1523, %v1553
      %v1572 = vmul.f32 %v1524, %v1555
      %v1573 = vmul.f32 %v1525, %v1557
      %v1574 = vadd.f32 %v1566, %v1397
      %v1575 = vadd.f32 %v1567, %v1398
      %v1576 = vadd.f32 %v1568, %v1399
      %v1577 = vadd.f32 %v1569, %v1400
      %v1578 = vadd.f32 %v1570, %v1401
      %v1579 = vadd.f32 %v1571, %v1402
      %v1580 = vadd.f32 %v1572, %v1403
      %v1581 = vadd.f32 %v1573, %v1404
      %v1582 = vpack.c.bf16 %v1575, %v1574
      %v1583 = vpack.c.bf16 %v1577, %v1576
      %v1584 = vpack.c.bf16 %v1579, %v1578
      %v1585 = vpack.c.bf16 %v1581, %v1580
      %v1586 = vld [vmem:[%s717] sm:$0xf]
      %v1587 = vld [vmem:[%s717 + $0x4] sm:$0xf]
      %v1588 = vld [vmem:[%s717 + $0x8] sm:$0xf]
      %v1589 = vld [vmem:[%s717 + $0xc] sm:$0xf]
      %v1590 = vlaneseq
      %v1591 = vshrl.u32 %v1590, 7
      %v1592 = vsub.s32 3, %v1591
      %v1593 = vrot.slane %v1278, %v1592
      %v1598 = vunpack.c.l.b16 %v1586
      %v1599 = vunpack.c.l.b16 %v1587
      %v1600 = vunpack.c.l.b16 %v1588
      %v1601 = vunpack.c.l.b16 %v1589
      %v1602 = vpack.c.b16 %v1599, %v1598
      %v1603 = vpack.c.b16 %v1601, %v1600
      %v1607 = vsel %vm1315, %v1582, 0
      %v1610 = vsel %vm1315, %v1583, 0
      %v1613 = vsel %vm1315, %v1584, 0
      %v1616 = vsel %vm1315, %v1585, 0
      %1618 = vmatprep.subr.bf16.mxu0 0
      %1619 = vmatpush1.bf16.msra.mxu0 0
      %1620 = vmatprep.subr.bf16.mxu0 0
      %1621 = vmatpush1.bf16.msra.mxu0 0
      %1622 = vmatprep.subr.bf16.mxu0 0
      %1623 = vmatpush1.bf16.msra.mxu0 0
      %1624 = vmatprep.subr.bf16.mxu0 0
      %1625 = vmatpush1.bf16.msra.mxu0 0
      %1626 = vmatprep.subr.bf16.mxu0 0
      %1627 = vmatpush1.bf16.msra.mxu0 0
      %1628 = vmatprep.subr.bf16.mxu0 0
      %1629 = vmatpush1.bf16.msra.mxu0 0
      %1630 = vmatprep.subr.bf16.mxu0 0
      %1631 = vmatpush1.bf16.msra.mxu0 %v1603
      %1632 = vmatprep.subr.bf16.mxu0 0
      %1633 = vmatpush1.bf16.msra.mxu0 %v1602
      %1634 = vmatprep.subr.bf16.mxu0 0
      %1635 = vmatpush2.bf16.msra.mxu0 0
      %1636 = vmatprep.subr.bf16.mxu0 0
      %1637 = vmatpush2.bf16.msra.mxu0 0
      %1638 = vmatprep.subr.bf16.mxu0 0
      %1639 = vmatpush2.bf16.msra.mxu0 0
      %1640 = vmatprep.subr.bf16.mxu0 0
      %1641 = vmatpush2.bf16.msra.mxu0 0
      %1642 = vmatprep.subr.bf16.mxu0 0
      %1643 = vmatpush2.bf16.msra.mxu0 0
      %1644 = vmatprep.subr.bf16.mxu0 0
      %1645 = vmatpush2.bf16.msra.mxu0 0
      %1646 = vmatprep.subr.bf16.mxu0 0
      %1647 = vmatpush2.bf16.msra.mxu0 0
      %1648 = vmatprep.subr.bf16.mxu0 0
      %1649 = vmatpush2.bf16.msra.mxu0 0
      %1650 = vmatprep.mubr.bf16.mxu0 0
      %1651 = vmatmul.mubr.bf16.gmra.mxu0 %v1607
      %v1652 = vpop.f32.mrf.mxu0
      %v1653 = vadd.f32 %v1593, %v1652
      %v1654 = vpop.f32.mrf.mxu0
      %v1655 = vpop.f32.mrf.mxu0
      %v1656 = vadd.f32 %v1593, %v1655
      %v1657 = vpop.f32.mrf.mxu0
      %1658 = vmatprep.mubr.bf16.mxu0 0
      %1659 = vmatmul.mubr.bf16.gmra.mxu0 %v1610
      %v1660 = vpop.f32.mrf.mxu0
      %v1661 = vadd.f32 %v1593, %v1660
      %v1662 = vpop.f32.mrf.mxu0
      %v1663 = vpop.f32.mrf.mxu0
      %v1664 = vadd.f32 %v1593, %v1663
      %v1665 = vpop.f32.mrf.mxu0
      %1666 = vmatprep.mubr.bf16.mxu0 0
      %1667 = vmatmul.mubr.bf16.gmra.mxu0 %v1613
      %v1668 = vpop.f32.mrf.mxu0
      %v1669 = vadd.f32 %v1593, %v1668
      %v1670 = vpop.f32.mrf.mxu0
      %v1671 = vpop.f32.mrf.mxu0
      %v1672 = vadd.f32 %v1593, %v1671
      %v1673 = vpop.f32.mrf.mxu0
      %1674 = vmatprep.mubr.bf16.mxu0 0
      %1675 = vmatmul.mubr.bf16.gmra.mxu0 %v1616
      %v1676 = vpop.f32.mrf.mxu0
      %v1677 = vadd.f32 %v1593, %v1676
      %v1678 = vpop.f32.mrf.mxu0
      %v1679 = vpop.f32.mrf.mxu0
      %v1680 = vadd.f32 %v1593, %v1679
      %v1681 = vpop.f32.mrf.mxu0
      %1682 = vdwg.mxu0
      %v1683 = vxor.u32 %v1653, 2147483648
      %v1684 = vxor.u32 %v1656, 2147483648
      %v1685 = vxor.u32 %v1661, 2147483648
      %v1686 = vxor.u32 %v1664, 2147483648
      %v1687 = vxor.u32 %v1669, 2147483648
      %v1688 = vxor.u32 %v1672, 2147483648
      %v1689 = vxor.u32 %v1677, 2147483648
      %v1690 = vxor.u32 %v1680, 2147483648
      %v1691 = vmul.f32 %v1683, 1.442695
      %v1692 = vpow.pop %v1691
      %v1693 = vmul.f32 %v1684, 1.442695
      %v1694 = vpow.pop %v1693
      %v1695 = vmul.f32 %v1685, 1.442695
      %v1696 = vpow.pop %v1695
      %v1697 = vmul.f32 %v1686, 1.442695
      %v1698 = vpow.pop %v1697
      %v1699 = vmul.f32 %v1687, 1.442695
      %v1700 = vpow.pop %v1699
      %v1701 = vmul.f32 %v1688, 1.442695
      %v1702 = vpow.pop %v1701
      %v1703 = vmul.f32 %v1689, 1.442695
      %v1704 = vpow.pop %v1703
      %v1705 = vmul.f32 %v1690, 1.442695
      %v1706 = vpow.pop %v1705
      %v1707 = vadd.f32 %v1692, 1.0
      %v1708 = vadd.f32 %v1694, 1.0
      %v1709 = vadd.f32 %v1696, 1.0
      %v1710 = vadd.f32 %v1698, 1.0
      %v1711 = vadd.f32 %v1700, 1.0
      %v1712 = vadd.f32 %v1702, 1.0
      %v1713 = vadd.f32 %v1704, 1.0
      %v1714 = vadd.f32 %v1706, 1.0
      %v1715 = vrcp.pop %v1707
      %v1716 = vmul.f32 1.0, %v1715
      %v1717 = vrcp.pop %v1708
      %v1718 = vmul.f32 1.0, %v1717
      %v1719 = vrcp.pop %v1709
      %v1720 = vmul.f32 1.0, %v1719
      %v1721 = vrcp.pop %v1710
      %v1722 = vmul.f32 1.0, %v1721
      %v1723 = vrcp.pop %v1711
      %v1724 = vmul.f32 1.0, %v1723
      %v1725 = vrcp.pop %v1712
      %v1726 = vmul.f32 1.0, %v1725
      %v1727 = vrcp.pop %v1713
      %v1728 = vmul.f32 1.0, %v1727
      %v1729 = vrcp.pop %v1714
      %v1730 = vmul.f32 1.0, %v1729
      %v1731 = vmul.f32 %v1653, %v1716
      %v1732 = vmul.f32 %v1656, %v1718
      %v1733 = vmul.f32 %v1661, %v1720
      %v1734 = vmul.f32 %v1664, %v1722
      %v1735 = vmul.f32 %v1669, %v1724
      %v1736 = vmul.f32 %v1672, %v1726
      %v1737 = vmul.f32 %v1677, %v1728
      %v1738 = vmul.f32 %v1680, %v1730
      %v1739 = vpack.c.bf16 %v1732, %v1731
      %v1740 = vpack.c.bf16 %v1734, %v1733
      %v1741 = vpack.c.bf16 %v1736, %v1735
      %v1742 = vpack.c.bf16 %v1738, %v1737
      %v1743 = vld [vmem:[%s722] sm:$0xf]
      %v1744 = vld [vmem:[%s722 + $0x4] sm:$0xf]
      %v1745 = vld [vmem:[%s722 + $0x8] sm:$0xf]
      %v1746 = vld [vmem:[%s722 + $0xc] sm:$0xf]
      %v1747 = vlaneseq
      %v1748 = vshrl.u32 %v1747, 7
      %v1749 = vsub.s32 4, %v1748
      %v1750 = vrot.slane %v1278, %v1749
      %v1755 = vunpack.c.l.b16 %v1743
      %v1756 = vunpack.c.l.b16 %v1744
      %v1757 = vunpack.c.l.b16 %v1745
      %v1758 = vunpack.c.l.b16 %v1746
      %v1759 = vpack.c.b16 %v1756, %v1755
      %v1760 = vpack.c.b16 %v1758, %v1757
      %v1764 = vsel %vm1315, %v1739, 0
      %v1767 = vsel %vm1315, %v1740, 0
      %v1770 = vsel %vm1315, %v1741, 0
      %v1773 = vsel %vm1315, %v1742, 0
      %1775 = vmatprep.subr.bf16.mxu0 0
      %1776 = vmatpush1.bf16.msra.mxu0 0
      %1777 = vmatprep.subr.bf16.mxu0 0
      %1778 = vmatpush1.bf16.msra.mxu0 0
      %1779 = vmatprep.subr.bf16.mxu0 0
      %1780 = vmatpush1.bf16.msra.mxu0 0
      %1781 = vmatprep.subr.bf16.mxu0 0
      %1782 = vmatpush1.bf16.msra.mxu0 0
      %1783 = vmatprep.subr.bf16.mxu0 0
      %1784 = vmatpush1.bf16.msra.mxu0 0
      %1785 = vmatprep.subr.bf16.mxu0 0
      %1786 = vmatpush1.bf16.msra.mxu0 0
      %1787 = vmatprep.subr.bf16.mxu0 0
      %1788 = vmatpush1.bf16.msra.mxu0 %v1760
      %1789 = vmatprep.subr.bf16.mxu0 0
      %1790 = vmatpush1.bf16.msra.mxu0 %v1759
      %1791 = vmatprep.subr.bf16.mxu0 0
      %1792 = vmatpush2.bf16.msra.mxu0 0
      %1793 = vmatprep.subr.bf16.mxu0 0
      %1794 = vmatpush2.bf16.msra.mxu0 0
      %1795 = vmatprep.subr.bf16.mxu0 0
      %1796 = vmatpush2.bf16.msra.mxu0 0
      %1797 = vmatprep.subr.bf16.mxu0 0
      %1798 = vmatpush2.bf16.msra.mxu0 0
      %1799 = vmatprep.subr.bf16.mxu0 0
      %1800 = vmatpush2.bf16.msra.mxu0 0
      %1801 = vmatprep.subr.bf16.mxu0 0
      %1802 = vmatpush2.bf16.msra.mxu0 0
      %1803 = vmatprep.subr.bf16.mxu0 0
      %1804 = vmatpush2.bf16.msra.mxu0 0
      %1805 = vmatprep.subr.bf16.mxu0 0
      %1806 = vmatpush2.bf16.msra.mxu0 0
      %1807 = vmatprep.mubr.bf16.mxu0 0
      %1808 = vmatmul.mubr.bf16.gmra.mxu0 %v1764
      %v1809 = vpop.f32.mrf.mxu0
      %v1810 = vadd.f32 %v1750, %v1809
      %v1811 = vpop.f32.mrf.mxu0
      %v1812 = vpop.f32.mrf.mxu0
      %v1813 = vadd.f32 %v1750, %v1812
      %v1814 = vpop.f32.mrf.mxu0
      %1815 = vmatprep.mubr.bf16.mxu0 0
      %1816 = vmatmul.mubr.bf16.gmra.mxu0 %v1767
      %v1817 = vpop.f32.mrf.mxu0
      %v1818 = vadd.f32 %v1750, %v1817
      %v1819 = vpop.f32.mrf.mxu0
      %v1820 = vpop.f32.mrf.mxu0
      %v1821 = vadd.f32 %v1750, %v1820
      %v1822 = vpop.f32.mrf.mxu0
      %1823 = vmatprep.mubr.bf16.mxu0 0
      %1824 = vmatmul.mubr.bf16.gmra.mxu0 %v1770
      %v1825 = vpop.f32.mrf.mxu0
      %v1826 = vadd.f32 %v1750, %v1825
      %v1827 = vpop.f32.mrf.mxu0
      %v1828 = vpop.f32.mrf.mxu0
      %v1829 = vadd.f32 %v1750, %v1828
      %v1830 = vpop.f32.mrf.mxu0
      %1831 = vmatprep.mubr.bf16.mxu0 0
      %1832 = vmatmul.mubr.bf16.gmra.mxu0 %v1773
      %v1833 = vpop.f32.mrf.mxu0
      %v1834 = vadd.f32 %v1750, %v1833
      %v1835 = vpop.f32.mrf.mxu0
      %v1836 = vpop.f32.mrf.mxu0
      %v1837 = vadd.f32 %v1750, %v1836
      %v1838 = vpop.f32.mrf.mxu0
      %1839 = vdwg.mxu0
      %v1840 = vsel %vm1315, %v1810, 0.0
      %1841 = vadd.xlane.f32.xlu0 %v1840
      %v1842 = vpop.xlane.xlu0 %1841
      %v1843 = vsel %vm1315, %v1813, 0.0
      %1844 = vadd.xlane.f32.xlu0 %v1843
      %v1845 = vpop.xlane.xlu0 %1844
      %v1846 = vsel %vm1315, %v1818, 0.0
      %1847 = vadd.xlane.f32.xlu0 %v1846
      %v1848 = vpop.xlane.xlu0 %1847
      %v1849 = vsel %vm1315, %v1821, 0.0
      %1850 = vadd.xlane.f32.xlu0 %v1849
      %v1851 = vpop.xlane.xlu0 %1850
      %v1852 = vsel %vm1315, %v1826, 0.0
      %1853 = vadd.xlane.f32.xlu0 %v1852
      %v1854 = vpop.xlane.xlu0 %1853
      %v1855 = vsel %vm1315, %v1829, 0.0
      %1856 = vadd.xlane.f32.xlu0 %v1855
      %v1857 = vpop.xlane.xlu0 %1856
      %v1858 = vsel %vm1315, %v1834, 0.0
      %1859 = vadd.xlane.f32.xlu0 %v1858
      %v1860 = vpop.xlane.xlu0 %1859
      %v1861 = vsel %vm1315, %v1837, 0.0
      %1862 = vadd.xlane.f32.xlu0 %v1861
      %v1863 = vpop.xlane.xlu0 %1862
      %v1864 = vmul.f32 %v1842, %v1445
      %v1865 = vmul.f32 %v1845, %v1445
      %v1866 = vmul.f32 %v1848, %v1445
      %v1867 = vmul.f32 %v1851, %v1445
      %v1868 = vmul.f32 %v1854, %v1445
      %v1869 = vmul.f32 %v1857, %v1445
      %v1870 = vmul.f32 %v1860, %v1445
      %v1871 = vmul.f32 %v1863, %v1445
      %v1872 = vsub.f32 %v1810, %v1864
      %v1873 = vsub.f32 %v1813, %v1865
      %v1874 = vsub.f32 %v1818, %v1866
      %v1875 = vsub.f32 %v1821, %v1867
      %v1876 = vsub.f32 %v1826, %v1868
      %v1877 = vsub.f32 %v1829, %v1869
      %v1878 = vsub.f32 %v1834, %v1870
      %v1879 = vsub.f32 %v1837, %v1871
      %v1880 = vmul.f32 %v1872, %v1872
      %v1881 = vmul.f32 %v1873, %v1873
      %v1882 = vmul.f32 %v1874, %v1874
      %v1883 = vmul.f32 %v1875, %v1875
      %v1884 = vmul.f32 %v1876, %v1876
      %v1885 = vmul.f32 %v1877, %v1877
      %v1886 = vmul.f32 %v1878, %v1878
      %v1887 = vmul.f32 %v1879, %v1879
      %v1888 = vsel %vm1315, %v1880, 0.0
      %1889 = vadd.xlane.f32.xlu0 %v1888
      %v1890 = vpop.xlane.xlu0 %1889
      %v1891 = vsel %vm1315, %v1881, 0.0
      %1892 = vadd.xlane.f32.xlu0 %v1891
      %v1893 = vpop.xlane.xlu0 %1892
      %v1894 = vsel %vm1315, %v1882, 0.0
      %1895 = vadd.xlane.f32.xlu0 %v1894
      %v1896 = vpop.xlane.xlu0 %1895
      %v1897 = vsel %vm1315, %v1883, 0.0
      %1898 = vadd.xlane.f32.xlu0 %v1897
      %v1899 = vpop.xlane.xlu0 %1898
      %v1900 = vsel %vm1315, %v1884, 0.0
      %1901 = vadd.xlane.f32.xlu0 %v1900
      %v1902 = vpop.xlane.xlu0 %1901
      %v1903 = vsel %vm1315, %v1885, 0.0
      %1904 = vadd.xlane.f32.xlu0 %v1903
      %v1905 = vpop.xlane.xlu0 %1904
      %v1906 = vsel %vm1315, %v1886, 0.0
      %1907 = vadd.xlane.f32.xlu0 %v1906
      %v1908 = vpop.xlane.xlu0 %1907
      %v1909 = vsel %vm1315, %v1887, 0.0
      %1910 = vadd.xlane.f32.xlu0 %v1909
      %v1911 = vpop.xlane.xlu0 %1910
      %v1912 = vmul.f32 %v1890, %v1445
      %v1913 = vmul.f32 %v1893, %v1445
      %v1914 = vmul.f32 %v1896, %v1445
      %v1915 = vmul.f32 %v1899, %v1445
      %v1916 = vmul.f32 %v1902, %v1445
      %v1917 = vmul.f32 %v1905, %v1445
      %v1918 = vmul.f32 %v1908, %v1445
      %v1919 = vmul.f32 %v1911, %v1445
      %v1920 = vadd.f32 %v1912, 1e-05
      %v1921 = vadd.f32 %v1913, 1e-05
      %v1922 = vadd.f32 %v1914, 1e-05
      %v1923 = vadd.f32 %v1915, 1e-05
      %v1924 = vadd.f32 %v1916, 1e-05
      %v1925 = vadd.f32 %v1917, 1e-05
      %v1926 = vadd.f32 %v1918, 1e-05
      %v1927 = vadd.f32 %v1919, 1e-05
      %v1928 = vrsqrt.pop %v1920
      %v1929 = vrsqrt.pop %v1921
      %v1930 = vrsqrt.pop %v1922
      %v1931 = vrsqrt.pop %v1923
      %v1932 = vrsqrt.pop %v1924
      %v1933 = vrsqrt.pop %v1925
      %v1934 = vrsqrt.pop %v1926
      %v1935 = vrsqrt.pop %v1927
      %v1936 = vmul.f32 %v1872, %v1928
      %v1937 = vmul.f32 %v1873, %v1929
      %v1938 = vmul.f32 %v1874, %v1930
      %v1939 = vmul.f32 %v1875, %v1931
      %v1940 = vmul.f32 %v1876, %v1932
      %v1941 = vmul.f32 %v1877, %v1933
      %v1942 = vmul.f32 %v1878, %v1934
      %v1943 = vmul.f32 %v1879, %v1935
      %v1944 = vlaneseq
      %v1945 = vshrl.u32 %v1944, 7
      %v1946 = vsub.s32 5, %v1945
      %v1947 = vrot.slane %v1278, %v1946
      %v1948 = vmul.f32 %v1936, %v1947
      %v1949 = vmul.f32 %v1937, %v1947
      %v1950 = vmul.f32 %v1938, %v1947
      %v1951 = vmul.f32 %v1939, %v1947
      %v1952 = vmul.f32 %v1940, %v1947
      %v1953 = vmul.f32 %v1941, %v1947
      %v1954 = vmul.f32 %v1942, %v1947
      %v1955 = vmul.f32 %v1943, %v1947
      %v1956 = vlaneseq
      %v1957 = vshrl.u32 %v1956, 7
      %v1958 = vsub.s32 6, %v1957
      %v1959 = vrot.slane %v1278, %v1958
      %v1960 = vadd.f32 %v1948, %v1959
      %v1961 = vadd.f32 %v1949, %v1959
      %v1962 = vadd.f32 %v1950, %v1959
      %v1963 = vadd.f32 %v1951, %v1959
      %v1964 = vadd.f32 %v1952, %v1959
      %v1965 = vadd.f32 %v1953, %v1959
      %v1966 = vadd.f32 %v1954, %v1959
      %v1967 = vadd.f32 %v1955, %v1959
      %v1968 = vld [vmem:[%s712] sm:$0xf]
      %v1969 = vld [vmem:[%s712 + $0x4] sm:$0xf]
      %v1970 = vld [vmem:[%s712 + $0x8] sm:$0xf]
      %v1971 = vld [vmem:[%s712 + $0xc] sm:$0xf]
      %v1972 = vlaneseq
      %v1973 = vshrl.u32 %v1972, 7
      %v1974 = vsub.s32 2, %v1973
      %v1975 = vrot.slane %v1278, %v1974
      %v1980 = vunpack.c.l.b16 %v1968
      %v1981 = vunpack.c.l.b16 %v1969
      %v1982 = vunpack.c.l.b16 %v1970
      %v1983 = vunpack.c.l.b16 %v1971
      %v1984 = vpack.c.b16 %v1981, %v1980
      %v1985 = vpack.c.b16 %v1983, %v1982
      %1988 = vmatprep.subr.bf16.mxu0 0
      %1989 = vmatpush1.bf16.msra.mxu0 0
      %1990 = vmatprep.subr.bf16.mxu0 0
      %1991 = vmatpush1.bf16.msra.mxu0 0
      %1992 = vmatprep.subr.bf16.mxu0 0
      %1993 = vmatpush1.bf16.msra.mxu0 0
      %1994 = vmatprep.subr.bf16.mxu0 0
      %1995 = vmatpush1.bf16.msra.mxu0 0
      %1996 = vmatprep.subr.bf16.mxu0 0
      %1997 = vmatpush1.bf16.msra.mxu0 0
      %1998 = vmatprep.subr.bf16.mxu0 0
      %1999 = vmatpush1.bf16.msra.mxu0 0
      %2000 = vmatprep.subr.bf16.mxu0 0
      %2001 = vmatpush1.bf16.msra.mxu0 %v1985
      %2002 = vmatprep.subr.bf16.mxu0 0
      %2003 = vmatpush1.bf16.msra.mxu0 %v1984
      %2004 = vmatprep.subr.bf16.mxu0 0
      %2005 = vmatpush2.bf16.msra.mxu0 0
      %2006 = vmatprep.subr.bf16.mxu0 0
      %2007 = vmatpush2.bf16.msra.mxu0 0
      %2008 = vmatprep.subr.bf16.mxu0 0
      %2009 = vmatpush2.bf16.msra.mxu0 0
      %2010 = vmatprep.subr.bf16.mxu0 0
      %2011 = vmatpush2.bf16.msra.mxu0 0
      %2012 = vmatprep.subr.bf16.mxu0 0
      %2013 = vmatpush2.bf16.msra.mxu0 0
      %2014 = vmatprep.subr.bf16.mxu0 0
      %2015 = vmatpush2.bf16.msra.mxu0 0
      %2016 = vmatprep.subr.bf16.mxu0 0
      %2017 = vmatpush2.bf16.msra.mxu0 0
      %2018 = vmatprep.subr.bf16.mxu0 0
      %2019 = vmatpush2.bf16.msra.mxu0 0
      %2020 = vmatprep.mubr.bf16.mxu0 0
      %2021 = vmatmul.mubr.bf16.gmra.mxu0 %v1317
      %v2022 = vpop.f32.mrf.mxu0
      %v2023 = vadd.f32 %v1975, %v2022
      %v2024 = vpop.f32.mrf.mxu0
      %v2025 = vpop.f32.mrf.mxu0
      %v2026 = vadd.f32 %v1975, %v2025
      %v2027 = vpop.f32.mrf.mxu0
      %2028 = vmatprep.mubr.bf16.mxu0 0
      %2029 = vmatmul.mubr.bf16.gmra.mxu0 %v1320
      %v2030 = vpop.f32.mrf.mxu0
      %v2031 = vadd.f32 %v1975, %v2030
      %v2032 = vpop.f32.mrf.mxu0
      %v2033 = vpop.f32.mrf.mxu0
      %v2034 = vadd.f32 %v1975, %v2033
      %v2035 = vpop.f32.mrf.mxu0
      %2036 = vmatprep.mubr.bf16.mxu0 0
      %2037 = vmatmul.mubr.bf16.gmra.mxu0 %v1323
      %v2038 = vpop.f32.mrf.mxu0
      %v2039 = vadd.f32 %v1975, %v2038
      %v2040 = vpop.f32.mrf.mxu0
      %v2041 = vpop.f32.mrf.mxu0
      %v2042 = vadd.f32 %v1975, %v2041
      %v2043 = vpop.f32.mrf.mxu0
      %2044 = vmatprep.mubr.bf16.mxu0 0
      %2045 = vmatmul.mubr.bf16.gmra.mxu0 %v1326
      %v2046 = vpop.f32.mrf.mxu0
      %v2047 = vadd.f32 %v1975, %v2046
      %v2048 = vpop.f32.mrf.mxu0
      %v2049 = vpop.f32.mrf.mxu0
      %v2050 = vadd.f32 %v1975, %v2049
      %v2051 = vpop.f32.mrf.mxu0
      %2052 = vdwg.mxu0
      %v2053 = vmul.f32 %v1960, %v2023
      %v2054 = vmul.f32 %v1961, %v2026
      %v2055 = vmul.f32 %v1962, %v2031
      %v2056 = vmul.f32 %v1963, %v2034
      %v2057 = vmul.f32 %v1964, %v2039
      %v2058 = vmul.f32 %v1965, %v2042
      %v2059 = vmul.f32 %v1966, %v2047
      %v2060 = vmul.f32 %v1967, %v2050
      %v2061 = vadd.f32 %v2053, %v1270
      %v2062 = vadd.f32 %v2054, %v1271
      %v2063 = vadd.f32 %v2055, %v1272
      %v2064 = vadd.f32 %v2056, %v1273
      %v2065 = vadd.f32 %v2057, %v1274
      %v2066 = vadd.f32 %v2058, %v1275
      %v2067 = vadd.f32 %v2059, %v1276
      %v2068 = vadd.f32 %v2060, %v1277
      %2069 = vst.msk [vmem:[#allocation2] sm:$0xff] %vm1315, %v2061
      %2070 = vst.msk [vmem:[#allocation2 + $0x8] sm:$0xff] %vm1315, %v2062
      %2071 = vst.msk [vmem:[#allocation2 + $0x10] sm:$0xff] %vm1315, %v2063
      %2072 = vst.msk [vmem:[#allocation2 + $0x18] sm:$0xff] %vm1315, %v2064
      %2073 = vst.msk [vmem:[#allocation2 + $0x20] sm:$0xff] %vm1315, %v2065
      %2074 = vst.msk [vmem:[#allocation2 + $0x28] sm:$0xff] %vm1315, %v2066
      %2075 = vst.msk [vmem:[#allocation2 + $0x30] sm:$0xff] %vm1315, %v2067
      %2076 = vst.msk [vmem:[#allocation2 + $0x38] sm:$0xff] %vm1315, %v2068
      %p2077 = scmp.eq.s32.totalorder %s34, 1
      // Predicated region
      $region97: #{_lambda_.1} parent=91 // pred_check
        %p2078 = pneg %p2077
      $region98: #{_lambda_.1} parent=91 // pred_check_branch
        %2080 = sbr.rel (%p2078) target = $region100
      $region99: #{_lambda_.1} parent=91 // pred_region
        %v2081 = vld [vmem:[%s11] sm:$0xf]
        %v2082 = vld [vmem:[%s11 + $0x4] sm:$0xf]
        %v2083 = vld [vmem:[%s11 + $0x8] sm:$0xf]
        %v2084 = vld [vmem:[%s11 + $0xc] sm:$0xf]
        %v2085 = vld [vmem:[%s12] sm:$0x1]
        %v2087 = vlaneseq
        %v2088 = vshrl.u32 %v2087, 7
        %v2089 = vsub.s32 0, %v2088
        %v2090 = vrot.slane %v2085, %v2089
        %v2096 = vunpack.c.l.b16 %v2081
        %v2097 = vunpack.c.l.b16 %v2082
        %v2098 = vunpack.c.l.b16 %v2083
        %v2099 = vunpack.c.l.b16 %v2084
        %v2100 = vpack.c.b16 %v2097, %v2096
        %v2101 = vpack.c.b16 %v2099, %v2098
        %2104 = vmatprep.subr.bf16.mxu0 0
        %2105 = vmatpush1.bf16.msra.mxu0 0
        %2106 = vmatprep.subr.bf16.mxu0 0
        %2107 = vmatpush1.bf16.msra.mxu0 0
        %2108 = vmatprep.subr.bf16.mxu0 0
        %2109 = vmatpush1.bf16.msra.mxu0 0
        %2110 = vmatprep.subr.bf16.mxu0 0
        %2111 = vmatpush1.bf16.msra.mxu0 0
        %2112 = vmatprep.subr.bf16.mxu0 0
        %2113 = vmatpush1.bf16.msra.mxu0 0
        %2114 = vmatprep.subr.bf16.mxu0 0
        %2115 = vmatpush1.bf16.msra.mxu0 0
        %2116 = vmatprep.subr.bf16.mxu0 0
        %2117 = vmatpush1.bf16.msra.mxu0 %v2101
        %2118 = vmatprep.subr.bf16.mxu0 0
        %2119 = vmatpush1.bf16.msra.mxu0 %v2100
        %2120 = vmatprep.subr.bf16.mxu0 0
        %2121 = vmatpush2.bf16.msra.mxu0 0
        %2122 = vmatprep.subr.bf16.mxu0 0
        %2123 = vmatpush2.bf16.msra.mxu0 0
        %2124 = vmatprep.subr.bf16.mxu0 0
        %2125 = vmatpush2.bf16.msra.mxu0 0
        %2126 = vmatprep.subr.bf16.mxu0 0
        %2127 = vmatpush2.bf16.msra.mxu0 0
        %2128 = vmatprep.subr.bf16.mxu0 0
        %2129 = vmatpush2.bf16.msra.mxu0 0
        %2130 = vmatprep.subr.bf16.mxu0 0
        %2131 = vmatpush2.bf16.msra.mxu0 0
        %2132 = vmatprep.subr.bf16.mxu0 0
        %2133 = vmatpush2.bf16.msra.mxu0 0
        %2134 = vmatprep.subr.bf16.mxu0 0
        %2135 = vmatpush2.bf16.msra.mxu0 0
        %2136 = vmatprep.mubr.bf16.mxu0 0
        %2137 = vmatmul.mubr.bf16.gmra.mxu0 %v1317
        %v2138 = vpop.f32.mrf.mxu0
        %v2139 = vadd.f32 %v2090, %v2138
        %v2140 = vpop.f32.mrf.mxu0
        %v2141 = vpop.f32.mrf.mxu0
        %v2142 = vadd.f32 %v2090, %v2141
        %v2143 = vpop.f32.mrf.mxu0
        %2144 = vmatprep.mubr.bf16.mxu0 0
        %2145 = vmatmul.mubr.bf16.gmra.mxu0 %v1320
        %v2146 = vpop.f32.mrf.mxu0
        %v2147 = vadd.f32 %v2090, %v2146
        %v2148 = vpop.f32.mrf.mxu0
        %v2149 = vpop.f32.mrf.mxu0
        %v2150 = vadd.f32 %v2090, %v2149
        %v2151 = vpop.f32.mrf.mxu0
        %2152 = vmatprep.mubr.bf16.mxu0 0
        %2153 = vmatmul.mubr.bf16.gmra.mxu0 %v1323
        %v2154 = vpop.f32.mrf.mxu0
        %v2155 = vadd.f32 %v2090, %v2154
        %v2156 = vpop.f32.mrf.mxu0
        %v2157 = vpop.f32.mrf.mxu0
        %v2158 = vadd.f32 %v2090, %v2157
        %v2159 = vpop.f32.mrf.mxu0
        %2160 = vmatprep.mubr.bf16.mxu0 0
        %2161 = vmatmul.mubr.bf16.gmra.mxu0 %v1326
        %v2162 = vpop.f32.mrf.mxu0
        %v2163 = vadd.f32 %v2090, %v2162
        %v2164 = vpop.f32.mrf.mxu0
        %v2165 = vpop.f32.mrf.mxu0
        %v2166 = vadd.f32 %v2090, %v2165
        %v2167 = vpop.f32.mrf.mxu0
        %2168 = vdwg.mxu0
        %v2169 = vsel %vm1315, %v2061, 0.0
        %2170 = vadd.xlane.f32.xlu0 %v2169
        %v2171 = vpop.xlane.xlu0 %2170
        %v2172 = vsel %vm1315, %v2062, 0.0
        %2173 = vadd.xlane.f32.xlu0 %v2172
        %v2174 = vpop.xlane.xlu0 %2173
        %v2175 = vsel %vm1315, %v2063, 0.0
        %2176 = vadd.xlane.f32.xlu0 %v2175
        %v2177 = vpop.xlane.xlu0 %2176
        %v2178 = vsel %vm1315, %v2064, 0.0
        %2179 = vadd.xlane.f32.xlu0 %v2178
        %v2180 = vpop.xlane.xlu0 %2179
        %v2181 = vsel %vm1315, %v2065, 0.0
        %2182 = vadd.xlane.f32.xlu0 %v2181
        %v2183 = vpop.xlane.xlu0 %2182
        %v2184 = vsel %vm1315, %v2066, 0.0
        %2185 = vadd.xlane.f32.xlu0 %v2184
        %v2186 = vpop.xlane.xlu0 %2185
        %v2187 = vsel %vm1315, %v2067, 0.0
        %2188 = vadd.xlane.f32.xlu0 %v2187
        %v2189 = vpop.xlane.xlu0 %2188
        %v2190 = vsel %vm1315, %v2068, 0.0
        %2191 = vadd.xlane.f32.xlu0 %v2190
        %v2192 = vpop.xlane.xlu0 %2191
        %v2193 = vmul.f32 %v2171, %v1445
        %v2194 = vmul.f32 %v2174, %v1445
        %v2195 = vmul.f32 %v2177, %v1445
        %v2196 = vmul.f32 %v2180, %v1445
        %v2197 = vmul.f32 %v2183, %v1445
        %v2198 = vmul.f32 %v2186, %v1445
        %v2199 = vmul.f32 %v2189, %v1445
        %v2200 = vmul.f32 %v2192, %v1445
        %v2201 = vsub.f32 %v2061, %v2193
        %v2202 = vsub.f32 %v2062, %v2194
        %v2203 = vsub.f32 %v2063, %v2195
        %v2204 = vsub.f32 %v2064, %v2196
        %v2205 = vsub.f32 %v2065, %v2197
        %v2206 = vsub.f32 %v2066, %v2198
        %v2207 = vsub.f32 %v2067, %v2199
        %v2208 = vsub.f32 %v2068, %v2200
        %v2209 = vmul.f32 %v2201, %v2201
        %v2210 = vmul.f32 %v2202, %v2202
        %v2211 = vmul.f32 %v2203, %v2203
        %v2212 = vmul.f32 %v2204, %v2204
        %v2213 = vmul.f32 %v2205, %v2205
        %v2214 = vmul.f32 %v2206, %v2206
        %v2215 = vmul.f32 %v2207, %v2207
        %v2216 = vmul.f32 %v2208, %v2208
        %v2217 = vsel %vm1315, %v2209, 0.0
        %2218 = vadd.xlane.f32.xlu0 %v2217
        %v2219 = vpop.xlane.xlu0 %2218
        %v2220 = vsel %vm1315, %v2210, 0.0
        %2221 = vadd.xlane.f32.xlu0 %v2220
        %v2222 = vpop.xlane.xlu0 %2221
        %v2223 = vsel %vm1315, %v2211, 0.0
        %2224 = vadd.xlane.f32.xlu0 %v2223
        %v2225 = vpop.xlane.xlu0 %2224
        %v2226 = vsel %vm1315, %v2212, 0.0
        %2227 = vadd.xlane.f32.xlu0 %v2226
        %v2228 = vpop.xlane.xlu0 %2227
        %v2229 = vsel %vm1315, %v2213, 0.0
        %2230 = vadd.xlane.f32.xlu0 %v2229
        %v2231 = vpop.xlane.xlu0 %2230
        %v2232 = vsel %vm1315, %v2214, 0.0
        %2233 = vadd.xlane.f32.xlu0 %v2232
        %v2234 = vpop.xlane.xlu0 %2233
        %v2235 = vsel %vm1315, %v2215, 0.0
        %2236 = vadd.xlane.f32.xlu0 %v2235
        %v2237 = vpop.xlane.xlu0 %2236
        %v2238 = vsel %vm1315, %v2216, 0.0
        %2239 = vadd.xlane.f32.xlu0 %v2238
        %v2240 = vpop.xlane.xlu0 %2239
        %v2241 = vmul.f32 %v2219, %v1445
        %v2242 = vmul.f32 %v2222, %v1445
        %v2243 = vmul.f32 %v2225, %v1445
        %v2244 = vmul.f32 %v2228, %v1445
        %v2245 = vmul.f32 %v2231, %v1445
        %v2246 = vmul.f32 %v2234, %v1445
        %v2247 = vmul.f32 %v2237, %v1445
        %v2248 = vmul.f32 %v2240, %v1445
        %v2249 = vadd.f32 %v2241, 1e-06
        %v2250 = vadd.f32 %v2242, 1e-06
        %v2251 = vadd.f32 %v2243, 1e-06
        %v2252 = vadd.f32 %v2244, 1e-06
        %v2253 = vadd.f32 %v2245, 1e-06
        %v2254 = vadd.f32 %v2246, 1e-06
        %v2255 = vadd.f32 %v2247, 1e-06
        %v2256 = vadd.f32 %v2248, 1e-06
        %v2257 = vrsqrt.pop %v2249
        %v2258 = vrsqrt.pop %v2250
        %v2259 = vrsqrt.pop %v2251
        %v2260 = vrsqrt.pop %v2252
        %v2261 = vrsqrt.pop %v2253
        %v2262 = vrsqrt.pop %v2254
        %v2263 = vrsqrt.pop %v2255
        %v2264 = vrsqrt.pop %v2256
        %v2265 = vmul.f32 %v2201, %v2257
        %v2266 = vmul.f32 %v2202, %v2258
        %v2267 = vmul.f32 %v2203, %v2259
        %v2268 = vmul.f32 %v2204, %v2260
        %v2269 = vmul.f32 %v2205, %v2261
        %v2270 = vmul.f32 %v2206, %v2262
        %v2271 = vmul.f32 %v2207, %v2263
        %v2272 = vmul.f32 %v2208, %v2264
        %v2273 = vadd.f32 %v2139, 1.0
        %v2274 = vadd.f32 %v2142, 1.0
        %v2275 = vadd.f32 %v2147, 1.0
        %v2276 = vadd.f32 %v2150, 1.0
        %v2277 = vadd.f32 %v2155, 1.0
        %v2278 = vadd.f32 %v2158, 1.0
        %v2279 = vadd.f32 %v2163, 1.0
        %v2280 = vadd.f32 %v2166, 1.0
        %2289 = vrot.lane.b32.xlu0 %v2273, 96
        %v2290 = vpop.permute.xlu0 %2289
        %2291 = vrot.lane.b32.xlu0 %v2274, 96
        %v2292 = vpop.permute.xlu0 %2291
        %2293 = vrot.lane.b32.xlu0 %v2275, 96
        %v2294 = vpop.permute.xlu0 %2293
        %2295 = vrot.lane.b32.xlu0 %v2276, 96
        %v2296 = vpop.permute.xlu0 %2295
        %2297 = vrot.lane.b32.xlu0 %v2277, 96
        %v2298 = vpop.permute.xlu0 %2297
        %2299 = vrot.lane.b32.xlu0 %v2278, 96
        %v2300 = vpop.permute.xlu0 %2299
        %2301 = vrot.lane.b32.xlu0 %v2279, 96
        %v2302 = vpop.permute.xlu0 %2301
        %2303 = vrot.lane.b32.xlu0 %v2280, 96
        %v2304 = vpop.permute.xlu0 %2303
        %v2313 = vmul.f32 %v2265, %v2290
        %v2314 = vmul.f32 %v2266, %v2292
        %v2315 = vmul.f32 %v2267, %v2294
        %v2316 = vmul.f32 %v2268, %v2296
        %v2317 = vmul.f32 %v2269, %v2298
        %v2318 = vmul.f32 %v2270, %v2300
        %v2319 = vmul.f32 %v2271, %v2302
        %v2320 = vmul.f32 %v2272, %v2304
        %v2321 = vadd.f32 %v2313, %v2139
        %v2322 = vadd.f32 %v2314, %v2142
        %v2323 = vadd.f32 %v2315, %v2147
        %v2324 = vadd.f32 %v2316, %v2150
        %v2325 = vadd.f32 %v2317, %v2155
        %v2326 = vadd.f32 %v2318, %v2158
        %v2327 = vadd.f32 %v2319, %v2163
        %v2328 = vadd.f32 %v2320, %v2166
        %v2329 = vpack.c.bf16 %v2322, %v2321
        %v2330 = vpack.c.bf16 %v2324, %v2323
        %v2331 = vpack.c.bf16 %v2326, %v2325
        %v2332 = vpack.c.bf16 %v2328, %v2327
        %v2333 = vld [vmem:[%s9] sm:$0xff]
        %v2334 = vld [vmem:[%s9 + $0x8] sm:$0xff]
        %v2335 = vld [vmem:[%s9 + $0x10] sm:$0xff]
        %v2336 = vld [vmem:[%s9 + $0x18] sm:$0xff]
        %v2337 = vld [vmem:[%s10] sm:$0x3]
        %v2339 = vlaneseq
        %v2340 = vshrl.u32 %v2339, 7
        %v2341 = vsub.s32 0, %v2340
        %v2342 = vrot.slane %v2337, %v2341
        %v2343 = vlaneseq
        %v2344 = vshrl.u32 %v2343, 7
        %v2345 = vsub.s32 1, %v2344
        %v2346 = vrot.slane %v2337, %v2345
        %v2353 = vunpack.c.l.b16 %v2333
        %v2354 = vunpack.c.h.b16 %v2333
        %v2355 = vunpack.c.l.b16 %v2334
        %v2356 = vunpack.c.h.b16 %v2334
        %v2357 = vunpack.c.l.b16 %v2335
        %v2358 = vunpack.c.h.b16 %v2335
        %v2359 = vunpack.c.l.b16 %v2336
        %v2360 = vunpack.c.h.b16 %v2336
        %v2361 = vpack.c.b16 %v2355, %v2353
        %v2362 = vpack.c.b16 %v2356, %v2354
        %v2363 = vpack.c.b16 %v2359, %v2357
        %v2364 = vpack.c.b16 %v2360, %v2358
        %v2370 = vsel %vm1315, %v2329, 0
        %v2373 = vsel %vm1315, %v2330, 0
        %v2376 = vsel %vm1315, %v2331, 0
        %v2379 = vsel %vm1315, %v2332, 0
        %2381 = vmatprep.subr.bf16.mxu0 0
        %2382 = vmatpush1.bf16.msra.mxu0 0
        %2383 = vmatprep.subr.bf16.mxu0 0
        %2384 = vmatpush1.bf16.msra.mxu0 0
        %2385 = vmatprep.subr.bf16.mxu0 0
        %2386 = vmatpush1.bf16.msra.mxu0 0
        %2387 = vmatprep.subr.bf16.mxu0 0
        %2388 = vmatpush1.bf16.msra.mxu0 0
        %2389 = vmatprep.subr.bf16.mxu0 0
        %2390 = vmatpush1.bf16.msra.mxu0 0
        %2391 = vmatprep.subr.bf16.mxu0 0
        %2392 = vmatpush1.bf16.msra.mxu0 0
        %2393 = vmatprep.subr.bf16.mxu0 %v2364
        %2394 = vmatpush1.bf16.msra.mxu0 %v2363
        %2395 = vmatprep.subr.bf16.mxu0 %v2362
        %2396 = vmatpush1.bf16.msra.mxu0 %v2361
        %2397 = vmatprep.subr.bf16.mxu0 0
        %2398 = vmatpush2.bf16.msra.mxu0 0
        %2399 = vmatprep.subr.bf16.mxu0 0
        %2400 = vmatpush2.bf16.msra.mxu0 0
        %2401 = vmatprep.subr.bf16.mxu0 0
        %2402 = vmatpush2.bf16.msra.mxu0 0
        %2403 = vmatprep.subr.bf16.mxu0 0
        %2404 = vmatpush2.bf16.msra.mxu0 0
        %2405 = vmatprep.subr.bf16.mxu0 0
        %2406 = vmatpush2.bf16.msra.mxu0 0
        %2407 = vmatprep.subr.bf16.mxu0 0
        %2408 = vmatpush2.bf16.msra.mxu0 0
        %2409 = vmatprep.subr.bf16.mxu0 0
        %2410 = vmatpush2.bf16.msra.mxu0 0
        %2411 = vmatprep.subr.bf16.mxu0 0
        %2412 = vmatpush2.bf16.msra.mxu0 0
        %2413 = vmatprep.mubr.bf16.mxu0 0
        %2414 = vmatmul.mubr.bf16.gmra.mxu0 %v2370
        %v2415 = vpop.f32.mrf.mxu0
        %v2416 = vadd.f32 %v2342, %v2415
        %v2417 = vpop.f32.mrf.mxu0
        %v2418 = vadd.f32 %v2346, %v2417
        %v2419 = vpop.f32.mrf.mxu0
        %v2420 = vadd.f32 %v2342, %v2419
        %v2421 = vpop.f32.mrf.mxu0
        %v2422 = vadd.f32 %v2346, %v2421
        %2423 = vmatprep.mubr.bf16.mxu0 0
        %2424 = vmatmul.mubr.bf16.gmra.mxu0 %v2373
        %v2425 = vpop.f32.mrf.mxu0
        %v2426 = vadd.f32 %v2342, %v2425
        %v2427 = vpop.f32.mrf.mxu0
        %v2428 = vadd.f32 %v2346, %v2427
        %v2429 = vpop.f32.mrf.mxu0
        %v2430 = vadd.f32 %v2342, %v2429
        %v2431 = vpop.f32.mrf.mxu0
        %v2432 = vadd.f32 %v2346, %v2431
        %2433 = vmatprep.mubr.bf16.mxu0 0
        %2434 = vmatmul.mubr.bf16.gmra.mxu0 %v2376
        %v2435 = vpop.f32.mrf.mxu0
        %v2436 = vadd.f32 %v2342, %v2435
        %v2437 = vpop.f32.mrf.mxu0
        %v2438 = vadd.f32 %v2346, %v2437
        %v2439 = vpop.f32.mrf.mxu0
        %v2440 = vadd.f32 %v2342, %v2439
        %v2441 = vpop.f32.mrf.mxu0
        %v2442 = vadd.f32 %v2346, %v2441
        %2443 = vmatprep.mubr.bf16.mxu0 0
        %2444 = vmatmul.mubr.bf16.gmra.mxu0 %v2379
        %v2445 = vpop.f32.mrf.mxu0
        %v2446 = vadd.f32 %v2342, %v2445
        %v2447 = vpop.f32.mrf.mxu0
        %v2448 = vadd.f32 %v2346, %v2447
        %v2449 = vpop.f32.mrf.mxu0
        %v2450 = vadd.f32 %v2342, %v2449
        %v2451 = vpop.f32.mrf.mxu0
        %v2452 = vadd.f32 %v2346, %v2451
        %2453 = vdwg.mxu0
        %2454 = vst [vmem:[%s732] sm:$0xff] %v2416
        %2455 = vst [vmem:[%s732 + $0x8] sm:$0xff] %v2418
        %2456 = vst [vmem:[%s732 + $0x10] sm:$0xff] %v2420
        %2457 = vst [vmem:[%s732 + $0x18] sm:$0xff] %v2422
        %2458 = vst [vmem:[%s732 + $0x20] sm:$0xff] %v2426
        %2459 = vst [vmem:[%s732 + $0x28] sm:$0xff] %v2428
        %2460 = vst [vmem:[%s732 + $0x30] sm:$0xff] %v2430
        %2461 = vst [vmem:[%s732 + $0x38] sm:$0xff] %v2432
        %2462 = vst [vmem:[%s732 + $0x40] sm:$0xff] %v2436
        %2463 = vst [vmem:[%s732 + $0x48] sm:$0xff] %v2438
        %2464 = vst [vmem:[%s732 + $0x50] sm:$0xff] %v2440
        %2465 = vst [vmem:[%s732 + $0x58] sm:$0xff] %v2442
        %2466 = vst [vmem:[%s732 + $0x60] sm:$0xff] %v2446
        %2467 = vst [vmem:[%s732 + $0x68] sm:$0xff] %v2448
        %2468 = vst [vmem:[%s732 + $0x70] sm:$0xff] %v2450
        %2469 = vst [vmem:[%s732 + $0x78] sm:$0xff] %v2452
      $region100: #{_lambda_.1} parent=91 // pred_fallthru
        _
      %s2470 = smul.u32 8, %s33
      %p2471 = scmp.lt.s32.totalorder %s2470, 15
      %s2472 = scalar_select %p2471, %s2470, 15
      %s2473 = smul.addr %s2472, 2
      %s2474 = smul.addr %s2473, 8
      %s2475 = scalar_lea.vmem %s18, %s2474
      // Predicated region
      $region101: #{_lambda_.1} parent=91 // pred_check
        %p2476 = pneg %p477
      $region102: #{_lambda_.1} parent=91 // pred_check_branch
        %2478 = sbr.rel (%p2476) target = $region104
      $region103: #{_lambda_.1} parent=91 // pred_region
        %s2479 = smul.u32 8, %s33
      $region104: #{_lambda_.1} parent=91 // pred_fallthru
        _
    $region92: #{_lambda_.1} parent=5 // pred_fallthru
      _
    %p2480 = scmp.le.s32.totalorder 2, %s24
    // Predicated region
    $region105: #{_lambda_.1} parent=5 // pred_check
      %p2481 = pneg %p2480
    $region106: #{_lambda_.1} parent=5 // pred_check_branch
      %2483 = sbr.rel (%p2481) target = $region108
    $region107: #{_lambda_.1} parent=5 // pred_region
      %s2484 = ssub.s32 %s24, 2
      // Predicated region
      $region109: #{_lambda_.1} parent=107 // pred_check
        %p2485 = pneg %p483
      $region110: #{_lambda_.1} parent=107 // pred_check_branch
        %2487 = sbr.rel (%p2485) target = $region112
      $region111: #{_lambda_.1} parent=107 // pred_region
        %s2488 = smul.u32 8, %s35
        %p2489 = scmp.lt.s32.totalorder %s2488, 15
        %s2490 = scalar_select %p2489, %s2488, 15
        %s2491 = smul.addr %s2490, 2
        %s2492 = smul.addr %s2491, 8
        %s2493 = scalar_lea.vmem %s18, %s2492
      $region112: #{_lambda_.1} parent=107 // pred_fallthru
        _
    $region108: #{_lambda_.1} parent=5 // pred_fallthru
      _
  $region6: #{_lambda_.1} parent=0 // loop_footer
    %s28 = sadd.s32 1, %s24
  $region7: #{_lambda_.1} parent=0 // loop_footer_branch
    %23 = sbr.rel target = $region3
  $region8: #{_lambda_.1} parent=0 // loop_exit
    _

</llo_original>
